<compile_context>
chip_gen: v5e
topology: v5e:2x2
jax: 0.10.0
libtpu: 0.0.40
codegen_flags: <defaults>
</compile_context>

<pallas_src>
import jax
import jax.numpy as jnp
from jax.experimental import pallas as pl
from jax.experimental.pallas import tpu as pltpu


def _round_up(x, m):
    return ((x + m - 1) // m) * m


def _tpu_vmem_capacity_bytes():
    """Generation-aware VMEM capacity (64 MiB v7x, 128 MiB v5e/v6e)."""
    try:
        return int(pltpu.get_tpu_info().vmem_capacity_bytes)
    except Exception:
        return 64 * 1024 * 1024  # conservative floor (v7x)


def _choose_vocab_tile(H, Bp, V, requested_tile_v, vmem_cap):
    """Pick the vocab tile width TV (multiple of 128) for the streamed projection."""
    Vp0 = _round_up(V, 128)
    budget = int(vmem_cap * 0.70)          # leave headroom for compiler scratch
    # VMEM resident across the whole grid: log-prob output block (counted 2x to be
    # safe), GRU weight scratch, small per-row buffers, misc slack.
    resident = (2 * Bp * Vp0 * 4
                + 2 * H * 3 * H * 4
                + 8 * Bp * H * 4
                + (1 << 20))
    avail = budget - resident
    per_col = 2 * (H * 2 + 4)              # double-buffered bf16 wout col + f32 bias col
    tv_vmem = (avail // per_col) if avail > 0 else 128
    tv_target = max((4 * 1024 * 1024) // (2 * H), 512)   # ~4 MiB bf16 weight tile
    tv = min(int(tv_vmem), int(tv_target), Vp0)
    if requested_tile_v is not None:
        tv = min(tv, int(requested_tile_v))
    tv = max(128, (tv // 128) * 128)
    return tv


def _decoder_kernel(ids_ref,                      # SMEM (Bp,) int32   scalar-prefetched token ids
                    emb_hbm,                      # ANY  (V, H)        embedding table (HBM)
                    wgru_hbm,                     # ANY  (2, H, 3H)    stacked [W_ih^T, W_hh^T] (HBM)
                    h0_ref,                       # VMEM (Bp, H)       previous hidden state
                    bih_ref,                      # VMEM (1, 3H)       GRU input bias  [r|z|n]
                    bhh_ref,                      # VMEM (1, 3H)       GRU hidden bias [r|z|n]
                    wout_ref,                     # VMEM (H, TV) bf16  output-proj weight tile
                    bout_ref,                     # VMEM (1, TV)       output-proj bias tile
                    lp_ref,                       # OUT  (Bp, Vp)      log-probs (VMEM resident)
                    hnew_ref,                     # OUT  (Bp, H)       new hidden state
                    w_scr,                        # VMEM (2, H, 3H)    GRU weights (single-buffered)
                    x_scr,                        # VMEM (Bp, H)       gathered embeddings
                    h16_scr,                      # VMEM (Bp, H) bf16  pre-cast h_new
                    m_scr,                        # VMEM (Bp, 1)       running max
                    l_scr,                        # VMEM (Bp, 1)       running sum-exp
                    sem):                         # DMA sems (2,)
    v = pl.program_id(0)
    Bp, H = h0_ref.shape
    TV = wout_ref.shape[1]

    @pl.when(v == 0)
    def _prologue():
        # --- one-shot DMA of the GRU weights (never double-buffered) ---
        w_cp = pltpu.make_async_copy(wgru_hbm, w_scr, sem.at[0])
        w_cp.start()
        # --- in-kernel embedding gather: one row per token, shared DMA semaphore ---
        copies = []
        for i in range(Bp):
            cp = pltpu.make_async_copy(
                emb_hbm.at[pl.ds(ids_ref[i], 1), :],
                x_scr.at[pl.ds(i, 1), :],
                sem.at[1],
            )
            cp.start()
            copies.append(cp)
        for cp in copies:
            cp.wait()
        w_cp.wait()

        # --- ReLU(embedding) and single-step GRU (PyTorch gate order [r|z|n], f32) ---
        x = jnp.maximum(x_scr[...], 0.0)
        h = h0_ref[...]
        gx = jnp.dot(x, w_scr[0], preferred_element_type=jnp.float32) + bih_ref[...]
        gh = jnp.dot(h, w_scr[1], preferred_element_type=jnp.float32) + bhh_ref[...]
        r = jax.nn.sigmoid(gx[:, 0:H] + gh[:, 0:H])
        z = jax.nn.sigmoid(gx[:, H:2 * H] + gh[:, H:2 * H])
        n = jnp.tanh(gx[:, 2 * H:3 * H] + r * gh[:, 2 * H:3 * H])
        h_new = (1.0 - z) * n + z * h
        hnew_ref[...] = h_new
        h16_scr[...] = h_new.astype(h16_scr.dtype)   # cast once for bf16 streaming

        # --- init online-softmax state ---
        m_scr[...] = jnp.full(m_scr.shape, -jnp.inf, dtype=jnp.float32)
        l_scr[...] = jnp.zeros(l_scr.shape, dtype=jnp.float32)

    # --- vocab tile: bf16 weight stream, f32 accumulate, online logsumexp ---
    logits = jnp.dot(h16_scr[...], wout_ref[...],
                     preferred_element_type=jnp.float32) + bout_ref[...]
    col0 = pl.multiple_of(v * TV, 128)
    lp_ref[:, pl.ds(col0, TV)] = logits

    m_prev = m_scr[...]
    m_new = jnp.maximum(m_prev, jnp.max(logits, axis=-1, keepdims=True))
    l_scr[...] = (l_scr[...] * jnp.exp(m_prev - m_new)
                  + jnp.sum(jnp.exp(logits - m_new), axis=-1, keepdims=True))
    m_scr[...] = m_new

    @pl.when(v == pl.num_programs(0) - 1)
    def _epilogue():
        # In-kernel normalization: log_softmax = logits - logsumexp.
        # The resident output block is written back to HBM exactly once.
        lse = m_scr[...] + jnp.log(l_scr[...])
        lp_ref[...] = lp_ref[...] - lse


def language_decoder_forward(params, input_ids, hidden, *, tile_v=None):
    """Mirrors LanguageDecoder.forward(input, hidden, context) -> (log_probs, hidden).

    input_ids: int (B,) token indices
    hidden:    f32 (1, B, H)
    returns:   (log_probs (B, V) f32, hidden (1, B, H) f32)
    """
    emb = params["embedding"]                 # (V, H) f32
    w_gru = params["w_gru_stacked"]           # (2, H, 3H) f32  [W_ih^T, W_hh^T]
    b_ih = params["b_ih"]                     # (1, 3H) f32
    b_hh = params["b_hh"]                     # (1, 3H) f32
    w_out = params["w_out_t"]                 # (H, V) bf16 (streamed)
    b_out = params["b_out"]                   # (1, V) f32
    V, H = emb.shape
    assert H % 128 == 0, "hidden_size must be a multiple of 128 (lane alignment)"

    ids = input_ids.reshape(-1).astype(jnp.int32)
    B = ids.shape[0]
    Bp = _round_up(B, 8)

    vmem_cap = _tpu_vmem_capacity_bytes()
    TV = _choose_vocab_tile(H, Bp, V, tile_v, vmem_cap)
    NV = pl.cdiv(V, TV)
    Vp = NV * TV

    ids_p = jnp.pad(ids, (0, Bp - B))
    h0 = jnp.pad(hidden.reshape(B, H).astype(jnp.float32), ((0, Bp - B), (0, 0)))
    w_out_p = jnp.pad(w_out, ((0, 0), (0, Vp - V)))
    # padded vocab columns get a huge negative bias so they vanish from the softmax
    b_out_p = jnp.pad(b_out.astype(jnp.float32), ((0, 0), (0, Vp - V)),
                      constant_values=-1e30)

    log_probs_p, h_new = pl.pallas_call(
        _decoder_kernel,
        out_shape=(
            jax.ShapeDtypeStruct((Bp, Vp), jnp.float32),   # normalized log-probs
            jax.ShapeDtypeStruct((Bp, H), jnp.float32),    # new hidden
        ),
        grid_spec=pltpu.PrefetchScalarGridSpec(
            num_scalar_prefetch=1,                 # token ids -> SMEM
            grid=(NV,),
            in_specs=[
                pl.BlockSpec(memory_space=pl.ANY),                    # embedding table (HBM)
                pl.BlockSpec(memory_space=pl.ANY),                    # GRU weights (HBM, one DMA)
                pl.BlockSpec((Bp, H), lambda v, ids: (0, 0)),         # h0 (resident)
                pl.BlockSpec((1, 3 * H), lambda v, ids: (0, 0)),      # b_ih
                pl.BlockSpec((1, 3 * H), lambda v, ids: (0, 0)),      # b_hh
                pl.BlockSpec((H, TV), lambda v, ids: (0, v)),         # wout tile (streamed bf16)
                pl.BlockSpec((1, TV), lambda v, ids: (0, v)),         # bout tile
            ],
            out_specs=(
                pl.BlockSpec((Bp, Vp), lambda v, ids: (0, 0)),        # log-probs (VMEM resident)
                pl.BlockSpec((Bp, H), lambda v, ids: (0, 0)),         # h_new (resident)
            ),
            scratch_shapes=[
                pltpu.VMEM((2, H, 3 * H), jnp.float32),  # GRU weights (single-buffered)
                pltpu.VMEM((Bp, H), jnp.float32),        # gathered embeddings
                pltpu.VMEM((Bp, H), jnp.bfloat16),       # h_new pre-cast to bf16
                pltpu.VMEM((Bp, 1), jnp.float32),        # running max
                pltpu.VMEM((Bp, 1), jnp.float32),        # running sum-exp
                pltpu.SemaphoreType.DMA((2,)),           # [gru-weight DMA, embedding gather]
            ],
        ),
        compiler_params=pltpu.CompilerParams(
            dimension_semantics=("arbitrary",),          # online-LSE carry across V tiles
            vmem_limit_bytes=min(int(vmem_cap * 0.85), 128 * 1024 * 1024),
        ),
    )(ids_p, emb, w_gru, h0, b_ih, b_hh, w_out_p, b_out_p)

    log_probs = log_probs_p[:B, :V]                      # drop padding only
    return log_probs, h_new[:B].reshape(1, B, H)


def init_params(key, vocab_size, hidden_size):
    """Synthetic params matching nn.Embedding / nn.GRU(H,H) / nn.Linear(H,V) shapes."""
    ks = jax.random.split(key, 7)
    H, V = hidden_size, vocab_size
    scale = 1.0 / jnp.sqrt(jnp.float32(H))
    # PyTorch layouts: weight_ih_l0 (3H, H), weight_hh_l0 (3H, H), gates [r|z|n]
    w_ih = jax.random.uniform(ks[0], (3 * H, H), jnp.float32, -scale, scale)
    w_hh = jax.random.uniform(ks[1], (3 * H, H), jnp.float32, -scale, scale)
    b_ih = jax.random.uniform(ks[2], (3 * H,), jnp.float32, -scale, scale)
    b_hh = jax.random.uniform(ks[3], (3 * H,), jnp.float32, -scale, scale)
    w_out = jax.random.uniform(ks[4], (V, H), jnp.float32, -scale, scale)   # nn.Linear (V, H)
    b_out = jax.random.uniform(ks[5], (V,), jnp.float32, -scale, scale)
    emb = jax.random.normal(ks[6], (V, H), jnp.float32)

    return {
        "embedding": emb,
        "w_gru_stacked": jnp.stack([w_ih.T, w_hh.T]),   # (2, H, 3H), no zero padding
        "b_ih": b_ih.reshape(1, 3 * H),
        "b_hh": b_hh.reshape(1, 3 * H),
        "w_out_t": w_out.T.astype(jnp.bfloat16),        # (H, V), streamed in bf16
        "b_out": b_out.reshape(1, V),
        # full-precision PyTorch-layout copies for the reference check only
        "_ref": {"w_ih": w_ih, "w_hh": w_hh, "b_ih": b_ih, "b_hh": b_hh,
                 "w_out": w_out, "b_out": b_out},
    }


def _reference_forward(params, input_ids, hidden):
    """Pure-JAX f32 reference of the PyTorch forward."""
    p = params["_ref"]
    H = params["embedding"].shape[1]
    ids = input_ids.reshape(-1)
    B = ids.shape[0]
    x = jnp.maximum(jnp.take(params["embedding"], ids, axis=0), 0.0)
    h = hidden.reshape(B, H)
    gx = x @ p["w_ih"].T + p["b_ih"]
    gh = h @ p["w_hh"].T + p["b_hh"]
    r = jax.nn.sigmoid(gx[:, :H] + gh[:, :H])
    z = jax.nn.sigmoid(gx[:, H:2 * H] + gh[:, H:2 * H])
    n = jnp.tanh(gx[:, 2 * H:] + r * gh[:, 2 * H:])
    h_new = (1.0 - z) * n + z * h
    logits = h_new @ p["w_out"].T + p["b_out"]
    return jax.nn.log_softmax(logits, axis=-1), h_new.reshape(1, B, H)


if __name__ == "__main__":
    # Small but (8,128)-aligned shapes: batch=8, hidden=128, vocab=1024.
    B, H, V = 8, 128, 1024
    key = jax.random.PRNGKey(0)
    kp, ki, kh = jax.random.split(key, 3)

    params = init_params(kp, vocab_size=V, hidden_size=H)
    input_ids = jax.random.randint(ki, (B,), 0, V, dtype=jnp.int32)
    hidden0 = jax.random.normal(kh, (1, B, H), jnp.float32)
    # `context` is unused by the PyTorch forward, so it is omitted here.

    fwd = jax.jit(language_decoder_forward, static_argnames=("tile_v",))
    log_probs, hidden1 = fwd(params, input_ids, hidden0)
    jax.block_until_ready((log_probs, hidden1))

    ref_lp, ref_h = _reference_forward(params, input_ids, hidden0)
    assert log_probs.shape == (B, V) and hidden1.shape == (1, B, H)
    # GRU path is fully f32 -> tight; logits use bf16-streamed weights -> looser tolerance.
    assert bool(jnp.allclose(hidden1, ref_h, atol=1e-4, rtol=1e-4)), "hidden mismatch"
    assert bool(jnp.allclose(log_probs, ref_lp, atol=3e-2, rtol=3e-2)), "log_probs mismatch"
    assert bool(jnp.all(jnp.isfinite(log_probs))) and bool(jnp.all(jnp.isfinite(hidden1)))

    print("KERNEL_OK")
</pallas_src>

<mosaic_0001>
module attributes {stable_mosaic.version = 11 : i64} {
  func.func @_decoder_kernel(%arg0: i32, %arg1: memref<8xi32, #tpu.memory_space<smem>>, %arg2: memref<1024x128xf32, #tpu.memory_space<any>>, %arg3: memref<2x128x384xf32, #tpu.memory_space<any>>, %arg4: memref<8x128xf32, #tpu.memory_space<vmem>>, %arg5: memref<1x384xf32, #tpu.memory_space<vmem>>, %arg6: memref<1x384xf32, #tpu.memory_space<vmem>>, %arg7: memref<128x1024xbf16, #tpu.memory_space<vmem>>, %arg8: memref<1x1024xf32, #tpu.memory_space<vmem>>, %arg9: memref<8x1024xf32, #tpu.memory_space<vmem>>, %arg10: memref<8x128xf32, #tpu.memory_space<vmem>>, %arg11: memref<2x128x384xf32, #tpu.memory_space<vmem>>, %arg12: memref<8x128xf32, #tpu.memory_space<vmem>>, %arg13: memref<8x128xbf16, #tpu.memory_space<vmem>>, %arg14: memref<8x1xf32, #tpu.memory_space<vmem>>, %arg15: memref<8x1xf32, #tpu.memory_space<vmem>>, %arg16: memref<2x!tpu.dma_semaphore, #tpu.memory_space<semaphore_mem>>) attributes {dimension_semantics = [#tpu.dimension_semantics<arbitrary>], iteration_bounds = array<i64: 1>, scalar_prefetch = 1 : i64, scratch_operands = 6 : i64, tpu.core_type = #tpu.core_type<tc>, window_params = [{}, {}, {pipeline_mode = #tpu.pipeline_mode<synchronous>, transform_indices = @transform_2, window_bounds = array<i64: 8, 128>}, {pipeline_mode = #tpu.pipeline_mode<synchronous>, transform_indices = @transform_3, window_bounds = array<i64: 1, 384>}, {pipeline_mode = #tpu.pipeline_mode<synchronous>, transform_indices = @transform_4, window_bounds = array<i64: 1, 384>}, {transform_indices = @transform_5, window_bounds = array<i64: 128, 1024>}, {transform_indices = @transform_6, window_bounds = array<i64: 1, 1024>}, {pipeline_mode = #tpu.pipeline_mode<synchronous>, transform_indices = @transform_7, window_bounds = array<i64: 8, 1024>}, {pipeline_mode = #tpu.pipeline_mode<synchronous>, transform_indices = @transform_8, window_bounds = array<i64: 8, 128>}]} {
    %c0_i32 = arith.constant 0 : i32
    %0 = arith.cmpi eq, %arg0, %c0_i32 : i32
    %1 = arith.extui %0 : i1 to i32
    %c0_i32_0 = arith.constant 0 : i32
    %2 = arith.cmpi ne, %1, %c0_i32_0 : i32
    scf.if %2 {
      %c0_i32_19 = arith.constant 0 : i32
      %32 = tpu.memref_slice %arg16[%c0_i32_19] : memref<2x!tpu.dma_semaphore, #tpu.memory_space<semaphore_mem>> -> memref<1x!tpu.dma_semaphore, #tpu.memory_space<semaphore_mem>>
      %33 = tpu.memref_squeeze %32 : memref<1x!tpu.dma_semaphore, #tpu.memory_space<semaphore_mem>> -> memref<!tpu.dma_semaphore, #tpu.memory_space<semaphore_mem>>
      tpu.enqueue_dma source(%arg3 : memref<2x128x384xf32, #tpu.memory_space<any>>) target(%arg11 : memref<2x128x384xf32, #tpu.memory_space<vmem>>) target_semaphore(%33 : memref<!tpu.dma_semaphore, #tpu.memory_space<semaphore_mem>>)
      %c0_20 = arith.constant 0 : index
      %34 = memref.load %arg1[%c0_20] : memref<8xi32, #tpu.memory_space<smem>>
      %c1_i32 = arith.constant 1 : i32
      %c0_i32_21 = arith.constant 0 : i32
      %35 = tpu.memref_slice %arg2[%34, %c0_i32_21] : memref<1024x128xf32, #tpu.memory_space<any>> -> memref<1x128xf32, #tpu.memory_space<any>>
      %c0_i32_22 = arith.constant 0 : i32
      %c0_i32_23 = arith.constant 0 : i32
      %36 = tpu.memref_slice %arg12[%c0_i32_22, %c0_i32_23] : memref<8x128xf32, #tpu.memory_space<vmem>> -> memref<1x128xf32, #tpu.memory_space<vmem>>
      %37 = tpu.memref_slice %arg16[%c1_i32] : memref<2x!tpu.dma_semaphore, #tpu.memory_space<semaphore_mem>> -> memref<1x!tpu.dma_semaphore, #tpu.memory_space<semaphore_mem>>
      %38 = tpu.memref_squeeze %37 : memref<1x!tpu.dma_semaphore, #tpu.memory_space<semaphore_mem>> -> memref<!tpu.dma_semaphore, #tpu.memory_space<semaphore_mem>>
      tpu.enqueue_dma source(%35 : memref<1x128xf32, #tpu.memory_space<any>>) target(%36 : memref<1x128xf32, #tpu.memory_space<vmem>>) target_semaphore(%38 : memref<!tpu.dma_semaphore, #tpu.memory_space<semaphore_mem>>)
      %c1 = arith.constant 1 : index
      %39 = memref.load %arg1[%c1] : memref<8xi32, #tpu.memory_space<smem>>
      %c1_i32_24 = arith.constant 1 : i32
      %c0_i32_25 = arith.constant 0 : i32
      %40 = tpu.memref_slice %arg2[%39, %c0_i32_25] : memref<1024x128xf32, #tpu.memory_space<any>> -> memref<1x128xf32, #tpu.memory_space<any>>
      %c1_i32_26 = arith.constant 1 : i32
      %c0_i32_27 = arith.constant 0 : i32
      %41 = tpu.memref_slice %arg12[%c1_i32_26, %c0_i32_27] : memref<8x128xf32, #tpu.memory_space<vmem>> -> memref<1x128xf32, #tpu.memory_space<vmem>>
      %42 = tpu.memref_slice %arg16[%c1_i32_24] : memref<2x!tpu.dma_semaphore, #tpu.memory_space<semaphore_mem>> -> memref<1x!tpu.dma_semaphore, #tpu.memory_space<semaphore_mem>>
      %43 = tpu.memref_squeeze %42 : memref<1x!tpu.dma_semaphore, #tpu.memory_space<semaphore_mem>> -> memref<!tpu.dma_semaphore, #tpu.memory_space<semaphore_mem>>
      tpu.enqueue_dma source(%40 : memref<1x128xf32, #tpu.memory_space<any>>) target(%41 : memref<1x128xf32, #tpu.memory_space<vmem>>) target_semaphore(%43 : memref<!tpu.dma_semaphore, #tpu.memory_space<semaphore_mem>>)
      %c2 = arith.constant 2 : index
      %44 = memref.load %arg1[%c2] : memref<8xi32, #tpu.memory_space<smem>>
      %c1_i32_28 = arith.constant 1 : i32
      %c0_i32_29 = arith.constant 0 : i32
      %45 = tpu.memref_slice %arg2[%44, %c0_i32_29] : memref<1024x128xf32, #tpu.memory_space<any>> -> memref<1x128xf32, #tpu.memory_space<any>>
      %c2_i32 = arith.constant 2 : i32
      %c0_i32_30 = arith.constant 0 : i32
      %46 = tpu.memref_slice %arg12[%c2_i32, %c0_i32_30] : memref<8x128xf32, #tpu.memory_space<vmem>> -> memref<1x128xf32, #tpu.memory_space<vmem>>
      %47 = tpu.memref_slice %arg16[%c1_i32_28] : memref<2x!tpu.dma_semaphore, #tpu.memory_space<semaphore_mem>> -> memref<1x!tpu.dma_semaphore, #tpu.memory_space<semaphore_mem>>
      %48 = tpu.memref_squeeze %47 : memref<1x!tpu.dma_semaphore, #tpu.memory_space<semaphore_mem>> -> memref<!tpu.dma_semaphore, #tpu.memory_space<semaphore_mem>>
      tpu.enqueue_dma source(%45 : memref<1x128xf32, #tpu.memory_space<any>>) target(%46 : memref<1x128xf32, #tpu.memory_space<vmem>>) target_semaphore(%48 : memref<!tpu.dma_semaphore, #tpu.memory_space<semaphore_mem>>)
      %c3 = arith.constant 3 : index
      %49 = memref.load %arg1[%c3] : memref<8xi32, #tpu.memory_space<smem>>
      %c1_i32_31 = arith.constant 1 : i32
      %c0_i32_32 = arith.constant 0 : i32
      %50 = tpu.memref_slice %arg2[%49, %c0_i32_32] : memref<1024x128xf32, #tpu.memory_space<any>> -> memref<1x128xf32, #tpu.memory_space<any>>
      %c3_i32 = arith.constant 3 : i32
      %c0_i32_33 = arith.constant 0 : i32
      %51 = tpu.memref_slice %arg12[%c3_i32, %c0_i32_33] : memref<8x128xf32, #tpu.memory_space<vmem>> -> memref<1x128xf32, #tpu.memory_space<vmem>>
      %52 = tpu.memref_slice %arg16[%c1_i32_31] : memref<2x!tpu.dma_semaphore, #tpu.memory_space<semaphore_mem>> -> memref<1x!tpu.dma_semaphore, #tpu.memory_space<semaphore_mem>>
      %53 = tpu.memref_squeeze %52 : memref<1x!tpu.dma_semaphore, #tpu.memory_space<semaphore_mem>> -> memref<!tpu.dma_semaphore, #tpu.memory_space<semaphore_mem>>
      tpu.enqueue_dma source(%50 : memref<1x128xf32, #tpu.memory_space<any>>) target(%51 : memref<1x128xf32, #tpu.memory_space<vmem>>) target_semaphore(%53 : memref<!tpu.dma_semaphore, #tpu.memory_space<semaphore_mem>>)
      %c4 = arith.constant 4 : index
      %54 = memref.load %arg1[%c4] : memref<8xi32, #tpu.memory_space<smem>>
      %c1_i32_34 = arith.constant 1 : i32
      %c0_i32_35 = arith.constant 0 : i32
      %55 = tpu.memref_slice %arg2[%54, %c0_i32_35] : memref<1024x128xf32, #tpu.memory_space<any>> -> memref<1x128xf32, #tpu.memory_space<any>>
      %c4_i32 = arith.constant 4 : i32
      %c0_i32_36 = arith.constant 0 : i32
      %56 = tpu.memref_slice %arg12[%c4_i32, %c0_i32_36] : memref<8x128xf32, #tpu.memory_space<vmem>> -> memref<1x128xf32, #tpu.memory_space<vmem>>
      %57 = tpu.memref_slice %arg16[%c1_i32_34] : memref<2x!tpu.dma_semaphore, #tpu.memory_space<semaphore_mem>> -> memref<1x!tpu.dma_semaphore, #tpu.memory_space<semaphore_mem>>
      %58 = tpu.memref_squeeze %57 : memref<1x!tpu.dma_semaphore, #tpu.memory_space<semaphore_mem>> -> memref<!tpu.dma_semaphore, #tpu.memory_space<semaphore_mem>>
      tpu.enqueue_dma source(%55 : memref<1x128xf32, #tpu.memory_space<any>>) target(%56 : memref<1x128xf32, #tpu.memory_space<vmem>>) target_semaphore(%58 : memref<!tpu.dma_semaphore, #tpu.memory_space<semaphore_mem>>)
      %c5 = arith.constant 5 : index
      %59 = memref.load %arg1[%c5] : memref<8xi32, #tpu.memory_space<smem>>
      %c1_i32_37 = arith.constant 1 : i32
      %c0_i32_38 = arith.constant 0 : i32
      %60 = tpu.memref_slice %arg2[%59, %c0_i32_38] : memref<1024x128xf32, #tpu.memory_space<any>> -> memref<1x128xf32, #tpu.memory_space<any>>
      %c5_i32 = arith.constant 5 : i32
      %c0_i32_39 = arith.constant 0 : i32
      %61 = tpu.memref_slice %arg12[%c5_i32, %c0_i32_39] : memref<8x128xf32, #tpu.memory_space<vmem>> -> memref<1x128xf32, #tpu.memory_space<vmem>>
      %62 = tpu.memref_slice %arg16[%c1_i32_37] : memref<2x!tpu.dma_semaphore, #tpu.memory_space<semaphore_mem>> -> memref<1x!tpu.dma_semaphore, #tpu.memory_space<semaphore_mem>>
      %63 = tpu.memref_squeeze %62 : memref<1x!tpu.dma_semaphore, #tpu.memory_space<semaphore_mem>> -> memref<!tpu.dma_semaphore, #tpu.memory_space<semaphore_mem>>
      tpu.enqueue_dma source(%60 : memref<1x128xf32, #tpu.memory_space<any>>) target(%61 : memref<1x128xf32, #tpu.memory_space<vmem>>) target_semaphore(%63 : memref<!tpu.dma_semaphore, #tpu.memory_space<semaphore_mem>>)
      %c6 = arith.constant 6 : index
      %64 = memref.load %arg1[%c6] : memref<8xi32, #tpu.memory_space<smem>>
      %c1_i32_40 = arith.constant 1 : i32
      %c0_i32_41 = arith.constant 0 : i32
      %65 = tpu.memref_slice %arg2[%64, %c0_i32_41] : memref<1024x128xf32, #tpu.memory_space<any>> -> memref<1x128xf32, #tpu.memory_space<any>>
      %c6_i32 = arith.constant 6 : i32
      %c0_i32_42 = arith.constant 0 : i32
      %66 = tpu.memref_slice %arg12[%c6_i32, %c0_i32_42] : memref<8x128xf32, #tpu.memory_space<vmem>> -> memref<1x128xf32, #tpu.memory_space<vmem>>
      %67 = tpu.memref_slice %arg16[%c1_i32_40] : memref<2x!tpu.dma_semaphore, #tpu.memory_space<semaphore_mem>> -> memref<1x!tpu.dma_semaphore, #tpu.memory_space<semaphore_mem>>
      %68 = tpu.memref_squeeze %67 : memref<1x!tpu.dma_semaphore, #tpu.memory_space<semaphore_mem>> -> memref<!tpu.dma_semaphore, #tpu.memory_space<semaphore_mem>>
      tpu.enqueue_dma source(%65 : memref<1x128xf32, #tpu.memory_space<any>>) target(%66 : memref<1x128xf32, #tpu.memory_space<vmem>>) target_semaphore(%68 : memref<!tpu.dma_semaphore, #tpu.memory_space<semaphore_mem>>)
      %c7 = arith.constant 7 : index
      %69 = memref.load %arg1[%c7] : memref<8xi32, #tpu.memory_space<smem>>
      %c1_i32_43 = arith.constant 1 : i32
      %c0_i32_44 = arith.constant 0 : i32
      %70 = tpu.memref_slice %arg2[%69, %c0_i32_44] : memref<1024x128xf32, #tpu.memory_space<any>> -> memref<1x128xf32, #tpu.memory_space<any>>
      %c7_i32 = arith.constant 7 : i32
      %c0_i32_45 = arith.constant 0 : i32
      %71 = tpu.memref_slice %arg12[%c7_i32, %c0_i32_45] : memref<8x128xf32, #tpu.memory_space<vmem>> -> memref<1x128xf32, #tpu.memory_space<vmem>>
      %72 = tpu.memref_slice %arg16[%c1_i32_43] : memref<2x!tpu.dma_semaphore, #tpu.memory_space<semaphore_mem>> -> memref<1x!tpu.dma_semaphore, #tpu.memory_space<semaphore_mem>>
      %73 = tpu.memref_squeeze %72 : memref<1x!tpu.dma_semaphore, #tpu.memory_space<semaphore_mem>> -> memref<!tpu.dma_semaphore, #tpu.memory_space<semaphore_mem>>
      tpu.enqueue_dma source(%70 : memref<1x128xf32, #tpu.memory_space<any>>) target(%71 : memref<1x128xf32, #tpu.memory_space<vmem>>) target_semaphore(%73 : memref<!tpu.dma_semaphore, #tpu.memory_space<semaphore_mem>>)
      %c1_i32_46 = arith.constant 1 : i32
      %c0_i32_47 = arith.constant 0 : i32
      %74 = tpu.memref_slice %arg2[%34, %c0_i32_47] : memref<1024x128xf32, #tpu.memory_space<any>> -> memref<1x128xf32, #tpu.memory_space<any>>
      %c0_i32_48 = arith.constant 0 : i32
      %c0_i32_49 = arith.constant 0 : i32
      %75 = tpu.memref_slice %arg12[%c0_i32_48, %c0_i32_49] : memref<8x128xf32, #tpu.memory_space<vmem>> -> memref<1x128xf32, #tpu.memory_space<vmem>>
      %76 = tpu.memref_slice %arg16[%c1_i32_46] : memref<2x!tpu.dma_semaphore, #tpu.memory_space<semaphore_mem>> -> memref<1x!tpu.dma_semaphore, #tpu.memory_space<semaphore_mem>>
      %77 = tpu.memref_squeeze %76 : memref<1x!tpu.dma_semaphore, #tpu.memory_space<semaphore_mem>> -> memref<!tpu.dma_semaphore, #tpu.memory_space<semaphore_mem>>
      tpu.wait_dma2 semaphore(%77 : memref<!tpu.dma_semaphore, #tpu.memory_space<semaphore_mem>>) src(%74 : memref<1x128xf32, #tpu.memory_space<any>>) dst(%75 : memref<1x128xf32, #tpu.memory_space<vmem>>)
      %c1_i32_50 = arith.constant 1 : i32
      %c0_i32_51 = arith.constant 0 : i32
      %78 = tpu.memref_slice %arg2[%39, %c0_i32_51] : memref<1024x128xf32, #tpu.memory_space<any>> -> memref<1x128xf32, #tpu.memory_space<any>>
      %c1_i32_52 = arith.constant 1 : i32
      %c0_i32_53 = arith.constant 0 : i32
      %79 = tpu.memref_slice %arg12[%c1_i32_52, %c0_i32_53] : memref<8x128xf32, #tpu.memory_space<vmem>> -> memref<1x128xf32, #tpu.memory_space<vmem>>
      %80 = tpu.memref_slice %arg16[%c1_i32_50] : memref<2x!tpu.dma_semaphore, #tpu.memory_space<semaphore_mem>> -> memref<1x!tpu.dma_semaphore, #tpu.memory_space<semaphore_mem>>
      %81 = tpu.memref_squeeze %80 : memref<1x!tpu.dma_semaphore, #tpu.memory_space<semaphore_mem>> -> memref<!tpu.dma_semaphore, #tpu.memory_space<semaphore_mem>>
      tpu.wait_dma2 semaphore(%81 : memref<!tpu.dma_semaphore, #tpu.memory_space<semaphore_mem>>) src(%78 : memref<1x128xf32, #tpu.memory_space<any>>) dst(%79 : memref<1x128xf32, #tpu.memory_space<vmem>>)
      %c1_i32_54 = arith.constant 1 : i32
      %c0_i32_55 = arith.constant 0 : i32
      %82 = tpu.memref_slice %arg2[%44, %c0_i32_55] : memref<1024x128xf32, #tpu.memory_space<any>> -> memref<1x128xf32, #tpu.memory_space<any>>
      %c2_i32_56 = arith.constant 2 : i32
      %c0_i32_57 = arith.constant 0 : i32
      %83 = tpu.memref_slice %arg12[%c2_i32_56, %c0_i32_57] : memref<8x128xf32, #tpu.memory_space<vmem>> -> memref<1x128xf32, #tpu.memory_space<vmem>>
      %84 = tpu.memref_slice %arg16[%c1_i32_54] : memref<2x!tpu.dma_semaphore, #tpu.memory_space<semaphore_mem>> -> memref<1x!tpu.dma_semaphore, #tpu.memory_space<semaphore_mem>>
      %85 = tpu.memref_squeeze %84 : memref<1x!tpu.dma_semaphore, #tpu.memory_space<semaphore_mem>> -> memref<!tpu.dma_semaphore, #tpu.memory_space<semaphore_mem>>
      tpu.wait_dma2 semaphore(%85 : memref<!tpu.dma_semaphore, #tpu.memory_space<semaphore_mem>>) src(%82 : memref<1x128xf32, #tpu.memory_space<any>>) dst(%83 : memref<1x128xf32, #tpu.memory_space<vmem>>)
      %c1_i32_58 = arith.constant 1 : i32
      %c0_i32_59 = arith.constant 0 : i32
      %86 = tpu.memref_slice %arg2[%49, %c0_i32_59] : memref<1024x128xf32, #tpu.memory_space<any>> -> memref<1x128xf32, #tpu.memory_space<any>>
      %c3_i32_60 = arith.constant 3 : i32
      %c0_i32_61 = arith.constant 0 : i32
      %87 = tpu.memref_slice %arg12[%c3_i32_60, %c0_i32_61] : memref<8x128xf32, #tpu.memory_space<vmem>> -> memref<1x128xf32, #tpu.memory_space<vmem>>
      %88 = tpu.memref_slice %arg16[%c1_i32_58] : memref<2x!tpu.dma_semaphore, #tpu.memory_space<semaphore_mem>> -> memref<1x!tpu.dma_semaphore, #tpu.memory_space<semaphore_mem>>
      %89 = tpu.memref_squeeze %88 : memref<1x!tpu.dma_semaphore, #tpu.memory_space<semaphore_mem>> -> memref<!tpu.dma_semaphore, #tpu.memory_space<semaphore_mem>>
      tpu.wait_dma2 semaphore(%89 : memref<!tpu.dma_semaphore, #tpu.memory_space<semaphore_mem>>) src(%86 : memref<1x128xf32, #tpu.memory_space<any>>) dst(%87 : memref<1x128xf32, #tpu.memory_space<vmem>>)
      %c1_i32_62 = arith.constant 1 : i32
      %c0_i32_63 = arith.constant 0 : i32
      %90 = tpu.memref_slice %arg2[%54, %c0_i32_63] : memref<1024x128xf32, #tpu.memory_space<any>> -> memref<1x128xf32, #tpu.memory_space<any>>
      %c4_i32_64 = arith.constant 4 : i32
      %c0_i32_65 = arith.constant 0 : i32
      %91 = tpu.memref_slice %arg12[%c4_i32_64, %c0_i32_65] : memref<8x128xf32, #tpu.memory_space<vmem>> -> memref<1x128xf32, #tpu.memory_space<vmem>>
      %92 = tpu.memref_slice %arg16[%c1_i32_62] : memref<2x!tpu.dma_semaphore, #tpu.memory_space<semaphore_mem>> -> memref<1x!tpu.dma_semaphore, #tpu.memory_space<semaphore_mem>>
      %93 = tpu.memref_squeeze %92 : memref<1x!tpu.dma_semaphore, #tpu.memory_space<semaphore_mem>> -> memref<!tpu.dma_semaphore, #tpu.memory_space<semaphore_mem>>
      tpu.wait_dma2 semaphore(%93 : memref<!tpu.dma_semaphore, #tpu.memory_space<semaphore_mem>>) src(%90 : memref<1x128xf32, #tpu.memory_space<any>>) dst(%91 : memref<1x128xf32, #tpu.memory_space<vmem>>)
      %c1_i32_66 = arith.constant 1 : i32
      %c0_i32_67 = arith.constant 0 : i32
      %94 = tpu.memref_slice %arg2[%59, %c0_i32_67] : memref<1024x128xf32, #tpu.memory_space<any>> -> memref<1x128xf32, #tpu.memory_space<any>>
      %c5_i32_68 = arith.constant 5 : i32
      %c0_i32_69 = arith.constant 0 : i32
      %95 = tpu.memref_slice %arg12[%c5_i32_68, %c0_i32_69] : memref<8x128xf32, #tpu.memory_space<vmem>> -> memref<1x128xf32, #tpu.memory_space<vmem>>
      %96 = tpu.memref_slice %arg16[%c1_i32_66] : memref<2x!tpu.dma_semaphore, #tpu.memory_space<semaphore_mem>> -> memref<1x!tpu.dma_semaphore, #tpu.memory_space<semaphore_mem>>
      %97 = tpu.memref_squeeze %96 : memref<1x!tpu.dma_semaphore, #tpu.memory_space<semaphore_mem>> -> memref<!tpu.dma_semaphore, #tpu.memory_space<semaphore_mem>>
      tpu.wait_dma2 semaphore(%97 : memref<!tpu.dma_semaphore, #tpu.memory_space<semaphore_mem>>) src(%94 : memref<1x128xf32, #tpu.memory_space<any>>) dst(%95 : memref<1x128xf32, #tpu.memory_space<vmem>>)
      %c1_i32_70 = arith.constant 1 : i32
      %c0_i32_71 = arith.constant 0 : i32
      %98 = tpu.memref_slice %arg2[%64, %c0_i32_71] : memref<1024x128xf32, #tpu.memory_space<any>> -> memref<1x128xf32, #tpu.memory_space<any>>
      %c6_i32_72 = arith.constant 6 : i32
      %c0_i32_73 = arith.constant 0 : i32
      %99 = tpu.memref_slice %arg12[%c6_i32_72, %c0_i32_73] : memref<8x128xf32, #tpu.memory_space<vmem>> -> memref<1x128xf32, #tpu.memory_space<vmem>>
      %100 = tpu.memref_slice %arg16[%c1_i32_70] : memref<2x!tpu.dma_semaphore, #tpu.memory_space<semaphore_mem>> -> memref<1x!tpu.dma_semaphore, #tpu.memory_space<semaphore_mem>>
      %101 = tpu.memref_squeeze %100 : memref<1x!tpu.dma_semaphore, #tpu.memory_space<semaphore_mem>> -> memref<!tpu.dma_semaphore, #tpu.memory_space<semaphore_mem>>
      tpu.wait_dma2 semaphore(%101 : memref<!tpu.dma_semaphore, #tpu.memory_space<semaphore_mem>>) src(%98 : memref<1x128xf32, #tpu.memory_space<any>>) dst(%99 : memref<1x128xf32, #tpu.memory_space<vmem>>)
      %c1_i32_74 = arith.constant 1 : i32
      %c0_i32_75 = arith.constant 0 : i32
      %102 = tpu.memref_slice %arg2[%69, %c0_i32_75] : memref<1024x128xf32, #tpu.memory_space<any>> -> memref<1x128xf32, #tpu.memory_space<any>>
      %c7_i32_76 = arith.constant 7 : i32
      %c0_i32_77 = arith.constant 0 : i32
      %103 = tpu.memref_slice %arg12[%c7_i32_76, %c0_i32_77] : memref<8x128xf32, #tpu.memory_space<vmem>> -> memref<1x128xf32, #tpu.memory_space<vmem>>
      %104 = tpu.memref_slice %arg16[%c1_i32_74] : memref<2x!tpu.dma_semaphore, #tpu.memory_space<semaphore_mem>> -> memref<1x!tpu.dma_semaphore, #tpu.memory_space<semaphore_mem>>
      %105 = tpu.memref_squeeze %104 : memref<1x!tpu.dma_semaphore, #tpu.memory_space<semaphore_mem>> -> memref<!tpu.dma_semaphore, #tpu.memory_space<semaphore_mem>>
      tpu.wait_dma2 semaphore(%105 : memref<!tpu.dma_semaphore, #tpu.memory_space<semaphore_mem>>) src(%102 : memref<1x128xf32, #tpu.memory_space<any>>) dst(%103 : memref<1x128xf32, #tpu.memory_space<vmem>>)
      %c0_i32_78 = arith.constant 0 : i32
      %106 = tpu.memref_slice %arg16[%c0_i32_78] : memref<2x!tpu.dma_semaphore, #tpu.memory_space<semaphore_mem>> -> memref<1x!tpu.dma_semaphore, #tpu.memory_space<semaphore_mem>>
      %107 = tpu.memref_squeeze %106 : memref<1x!tpu.dma_semaphore, #tpu.memory_space<semaphore_mem>> -> memref<!tpu.dma_semaphore, #tpu.memory_space<semaphore_mem>>
      tpu.wait_dma2 semaphore(%107 : memref<!tpu.dma_semaphore, #tpu.memory_space<semaphore_mem>>) src(%arg3 : memref<2x128x384xf32, #tpu.memory_space<any>>) dst(%arg11 : memref<2x128x384xf32, #tpu.memory_space<vmem>>)
      %c0_79 = arith.constant 0 : index
      %c0_80 = arith.constant 0 : index
      %108 = vector.load %arg12[%c0_79, %c0_80] : memref<8x128xf32, #tpu.memory_space<vmem>>, vector<8x128xf32>
      %cst_81 = arith.constant 0.000000e+00 : f32
      %109 = vector.broadcast %cst_81 : f32 to vector<8x128xf32>
      %110 = arith.maximumf %108, %109 : vector<8x128xf32>
      %c0_82 = arith.constant 0 : index
      %c0_83 = arith.constant 0 : index
      %111 = vector.load %arg4[%c0_82, %c0_83] : memref<8x128xf32, #tpu.memory_space<vmem>>, vector<8x128xf32>
      %c0_84 = arith.constant 0 : index
      %c0_85 = arith.constant 0 : index
      %c0_86 = arith.constant 0 : index
      %112 = vector.load %arg11[%c0_84, %c0_85, %c0_86] : memref<2x128x384xf32, #tpu.memory_space<vmem>>, vector<1x128x384xf32>
      %113 = vector.shape_cast %112 : vector<1x128x384xf32> to vector<128x384xf32>
      %cst_87 = arith.constant dense<0.000000e+00> : vector<8x384xf32>
      %114 = tpu.matmul %110, %113, %cst_87 {dimension_numbers = #tpu.dot_dimension_numbers<[1], [0], [0], [1], [0, 0, 1, 1], [], []>} : vector<8x128xf32>, vector<128x384xf32>, vector<8x384xf32> -> vector<8x384xf32>
      %c0_88 = arith.constant 0 : index
      %c0_89 = arith.constant 0 : index
      %115 = vector.load %arg5[%c0_88, %c0_89] : memref<1x384xf32, #tpu.memory_space<vmem>>, vector<1x384xf32>
      %116 = vector.broadcast %115 : vector<1x384xf32> to vector<8x384xf32>
      %117 = arith.addf %114, %116 : vector<8x384xf32>
      %c1_90 = arith.constant 1 : index
      %c0_91 = arith.constant 0 : index
      %c0_92 = arith.constant 0 : index
      %118 = vector.load %arg11[%c1_90, %c0_91, %c0_92] : memref<2x128x384xf32, #tpu.memory_space<vmem>>, vector<1x128x384xf32>
      %119 = vector.shape_cast %118 : vector<1x128x384xf32> to vector<128x384xf32>
      %cst_93 = arith.constant dense<0.000000e+00> : vector<8x384xf32>
      %120 = tpu.matmul %111, %119, %cst_93 {dimension_numbers = #tpu.dot_dimension_numbers<[1], [0], [0], [1], [0, 0, 1, 1], [], []>} : vector<8x128xf32>, vector<128x384xf32>, vector<8x384xf32> -> vector<8x384xf32>
      %c0_94 = arith.constant 0 : index
      %c0_95 = arith.constant 0 : index
      %121 = vector.load %arg6[%c0_94, %c0_95] : memref<1x384xf32, #tpu.memory_space<vmem>>, vector<1x384xf32>
      %122 = vector.broadcast %121 : vector<1x384xf32> to vector<8x384xf32>
      %123 = arith.addf %120, %122 : vector<8x384xf32>
      %124 = vector.extract_strided_slice %117 {offsets = [0, 0], sizes = [8, 128], strides = [1, 1]} : vector<8x384xf32> to vector<8x128xf32>
      %125 = vector.extract_strided_slice %123 {offsets = [0, 0], sizes = [8, 128], strides = [1, 1]} : vector<8x384xf32> to vector<8x128xf32>
      %126 = arith.addf %124, %125 : vector<8x128xf32>
      %127 = arith.negf %126 : vector<8x128xf32>
      %128 = math.exp %127 : vector<8x128xf32>
      %cst_96 = arith.constant 1.000000e+00 : f32
      %129 = vector.broadcast %cst_96 : f32 to vector<8x128xf32>
      %130 = arith.addf %129, %128 : vector<8x128xf32>
      %131 = arith.divf %129, %130 : vector<8x128xf32>
      %132 = vector.extract_strided_slice %117 {offsets = [0, 128], sizes = [8, 128], strides = [1, 1]} : vector<8x384xf32> to vector<8x128xf32>
      %133 = vector.extract_strided_slice %123 {offsets = [0, 128], sizes = [8, 128], strides = [1, 1]} : vector<8x384xf32> to vector<8x128xf32>
      %134 = arith.addf %132, %133 : vector<8x128xf32>
      %135 = arith.negf %134 : vector<8x128xf32>
      %136 = math.exp %135 : vector<8x128xf32>
      %cst_97 = arith.constant 1.000000e+00 : f32
      %137 = vector.broadcast %cst_97 : f32 to vector<8x128xf32>
      %138 = arith.addf %137, %136 : vector<8x128xf32>
      %139 = arith.divf %137, %138 : vector<8x128xf32>
      %140 = vector.extract_strided_slice %117 {offsets = [0, 256], sizes = [8, 128], strides = [1, 1]} : vector<8x384xf32> to vector<8x128xf32>
      %141 = vector.extract_strided_slice %123 {offsets = [0, 256], sizes = [8, 128], strides = [1, 1]} : vector<8x384xf32> to vector<8x128xf32>
      %142 = arith.mulf %131, %141 : vector<8x128xf32>
      %143 = arith.addf %140, %142 : vector<8x128xf32>
      %144 = math.tanh %143 : vector<8x128xf32>
      %cst_98 = arith.constant 1.000000e+00 : f32
      %145 = vector.broadcast %cst_98 : f32 to vector<8x128xf32>
      %146 = arith.subf %145, %139 : vector<8x128xf32>
      %147 = arith.mulf %146, %144 : vector<8x128xf32>
      %148 = arith.mulf %139, %111 : vector<8x128xf32>
      %149 = arith.addf %147, %148 : vector<8x128xf32>
      %c0_99 = arith.constant 0 : index
      %c0_100 = arith.constant 0 : index
      %150 = vector.load %arg10[%c0_99, %c0_100] : memref<8x128xf32, #tpu.memory_space<vmem>>, vector<8x128xf32>
      tpu.vector_store %arg10[%c0_99, %c0_100], %149 {strides = array<i32>} : memref<8x128xf32, #tpu.memory_space<vmem>>, vector<8x128xf32>,
      %151 = arith.truncf %149 : vector<8x128xf32> to vector<8x128xbf16>
      %c0_101 = arith.constant 0 : index
      %c0_102 = arith.constant 0 : index
      %152 = vector.load %arg13[%c0_101, %c0_102] : memref<8x128xbf16, #tpu.memory_space<vmem>>, vector<8x128xbf16>
      tpu.vector_store %arg13[%c0_101, %c0_102], %151 {strides = array<i32>} : memref<8x128xbf16, #tpu.memory_space<vmem>>, vector<8x128xbf16>,
      %cst_103 = arith.constant 0xFF800000 : f32
      %153 = vector.broadcast %cst_103 : f32 to vector<8x1xf32>
      %c0_104 = arith.constant 0 : index
      %c0_105 = arith.constant 0 : index
      %154 = vector.load %arg14[%c0_104, %c0_105] : memref<8x1xf32, #tpu.memory_space<vmem>>, vector<8x1xf32>
      tpu.vector_store %arg14[%c0_104, %c0_105], %153 {strides = array<i32>} : memref<8x1xf32, #tpu.memory_space<vmem>>, vector<8x1xf32>,
      %cst_106 = arith.constant 0.000000e+00 : f32
      %155 = vector.broadcast %cst_106 : f32 to vector<8x1xf32>
      %c0_107 = arith.constant 0 : index
      %c0_108 = arith.constant 0 : index
      %156 = vector.load %arg15[%c0_107, %c0_108] : memref<8x1xf32, #tpu.memory_space<vmem>>, vector<8x1xf32>
      tpu.vector_store %arg15[%c0_107, %c0_108], %155 {strides = array<i32>} : memref<8x1xf32, #tpu.memory_space<vmem>>, vector<8x1xf32>,
    } else {
    }
    %c0 = arith.constant 0 : index
    %c0_1 = arith.constant 0 : index
    %3 = vector.load %arg13[%c0, %c0_1] : memref<8x128xbf16, #tpu.memory_space<vmem>>, vector<8x128xbf16>
    %c0_2 = arith.constant 0 : index
    %c0_3 = arith.constant 0 : index
    %4 = vector.load %arg7[%c0_2, %c0_3] : memref<128x1024xbf16, #tpu.memory_space<vmem>>, vector<128x1024xbf16>
    %cst = arith.constant dense<0.000000e+00> : vector<8x1024xf32>
    %5 = tpu.matmul %3, %4, %cst {dimension_numbers = #tpu.dot_dimension_numbers<[1], [0], [0], [1], [0, 0, 1, 1], [], []>} : vector<8x128xbf16>, vector<128x1024xbf16>, vector<8x1024xf32> -> vector<8x1024xf32>
    %c0_4 = arith.constant 0 : index
    %c0_5 = arith.constant 0 : index
    %6 = vector.load %arg8[%c0_4, %c0_5] : memref<1x1024xf32, #tpu.memory_space<vmem>>, vector<1x1024xf32>
    %7 = vector.broadcast %6 : vector<1x1024xf32> to vector<8x1024xf32>
    %8 = arith.addf %5, %7 : vector<8x1024xf32>
    %c1024_i32 = arith.constant 1024 : i32
    %9 = arith.muli %arg0, %c1024_i32 : i32
    %10 = tpu.assume_multiple %9, 128 : i32
    %c0_6 = arith.constant 0 : index
    %11 = arith.index_cast %10 : i32 to index
    %12 = vector.load %arg9[%c0_6, %11] : memref<8x1024xf32, #tpu.memory_space<vmem>>, vector<8x1024xf32>
    tpu.vector_store %arg9[%c0_6, %11], %8 {strides = array<i32>} : memref<8x1024xf32, #tpu.memory_space<vmem>>, vector<8x1024xf32>,
    %c0_7 = arith.constant 0 : index
    %c0_8 = arith.constant 0 : index
    %13 = vector.load %arg14[%c0_7, %c0_8] : memref<8x1xf32, #tpu.memory_space<vmem>>, vector<8x1xf32>
    %cst_9 = arith.constant dense<0xFF800000> : vector<8xf32>
    %14 = vector.multi_reduction <maximumf>, %8, %cst_9 [1] : vector<8x1024xf32> to vector<8xf32>
    %15 = vector.shape_cast %14 : vector<8xf32> to vector<8x1xf32>
    %16 = arith.maximumf %13, %15 : vector<8x1xf32>
    %c0_10 = arith.constant 0 : index
    %c0_11 = arith.constant 0 : index
    %17 = vector.load %arg15[%c0_10, %c0_11] : memref<8x1xf32, #tpu.memory_space<vmem>>, vector<8x1xf32>
    %18 = arith.subf %13, %16 : vector<8x1xf32>
    %19 = math.exp %18 : vector<8x1xf32>
    %20 = arith.mulf %17, %19 : vector<8x1xf32>
    %21 = vector.broadcast %16 : vector<8x1xf32> to vector<8x1024xf32>
    %22 = arith.subf %8, %21 : vector<8x1024xf32>
    %23 = math.exp %22 : vector<8x1024xf32>
    %cst_12 = arith.constant dense<0.000000e+00> : vector<8xf32>
    %24 = vector.multi_reduction <add>, %23, %cst_12 [1] : vector<8x1024xf32> to vector<8xf32>
    %25 = vector.shape_cast %24 : vector<8xf32> to vector<8x1xf32>
    %26 = arith.addf %20, %25 : vector<8x1xf32>
    %c0_13 = arith.constant 0 : index
    %c0_14 = arith.constant 0 : index
    %27 = vector.load %arg15[%c0_13, %c0_14] : memref<8x1xf32, #tpu.memory_space<vmem>>, vector<8x1xf32>
    tpu.vector_store %arg15[%c0_13, %c0_14], %26 {strides = array<i32>} : memref<8x1xf32, #tpu.memory_space<vmem>>, vector<8x1xf32>,
    %c0_15 = arith.constant 0 : index
    %c0_16 = arith.constant 0 : index
    %28 = vector.load %arg14[%c0_15, %c0_16] : memref<8x1xf32, #tpu.memory_space<vmem>>, vector<8x1xf32>
    tpu.vector_store %arg14[%c0_15, %c0_16], %16 {strides = array<i32>} : memref<8x1xf32, #tpu.memory_space<vmem>>, vector<8x1xf32>,
    %c0_i32_17 = arith.constant 0 : i32
    %29 = arith.cmpi eq, %arg0, %c0_i32_17 : i32
    %30 = arith.extui %29 : i1 to i32
    %c0_i32_18 = arith.constant 0 : i32
    %31 = arith.cmpi ne, %30, %c0_i32_18 : i32
    scf.if %31 {
      %c0_19 = arith.constant 0 : index
      %c0_20 = arith.constant 0 : index
      %32 = vector.load %arg14[%c0_19, %c0_20] : memref<8x1xf32, #tpu.memory_space<vmem>>, vector<8x1xf32>
      %c0_21 = arith.constant 0 : index
      %c0_22 = arith.constant 0 : index
      %33 = vector.load %arg15[%c0_21, %c0_22] : memref<8x1xf32, #tpu.memory_space<vmem>>, vector<8x1xf32>
      %34 = math.log %33 : vector<8x1xf32>
      %35 = arith.addf %32, %34 : vector<8x1xf32>
      %c0_23 = arith.constant 0 : index
      %c0_24 = arith.constant 0 : index
      %36 = vector.load %arg9[%c0_23, %c0_24] : memref<8x1024xf32, #tpu.memory_space<vmem>>, vector<8x1024xf32>
      %37 = vector.broadcast %35 : vector<8x1xf32> to vector<8x1024xf32>
      %38 = arith.subf %36, %37 : vector<8x1024xf32>
      %c0_25 = arith.constant 0 : index
      %c0_26 = arith.constant 0 : index
      %39 = vector.load %arg9[%c0_25, %c0_26] : memref<8x1024xf32, #tpu.memory_space<vmem>>, vector<8x1024xf32>
      tpu.vector_store %arg9[%c0_25, %c0_26], %38 {strides = array<i32>} : memref<8x1024xf32, #tpu.memory_space<vmem>>, vector<8x1024xf32>,
    } else {
    }
    return
  }
  func.func @transform_2(%arg0: i32, %arg1: memref<8xi32, #tpu.memory_space<smem>>) -> (i32, i32) {
    %c0_i32 = arith.constant 0 : i32
    %c0_i32_0 = arith.constant 0 : i32
    %c0_i32_1 = arith.constant 0 : i32
    return %c0_i32, %c0_i32_0 : i32, i32
  }
  func.func @transform_3(%arg0: i32, %arg1: memref<8xi32, #tpu.memory_space<smem>>) -> (i32, i32) {
    %c0_i32 = arith.constant 0 : i32
    %c0_i32_0 = arith.constant 0 : i32
    %c0_i32_1 = arith.constant 0 : i32
    return %c0_i32, %c0_i32_0 : i32, i32
  }
  func.func @transform_4(%arg0: i32, %arg1: memref<8xi32, #tpu.memory_space<smem>>) -> (i32, i32) {
    %c0_i32 = arith.constant 0 : i32
    %c0_i32_0 = arith.constant 0 : i32
    %c0_i32_1 = arith.constant 0 : i32
    return %c0_i32, %c0_i32_0 : i32, i32
  }
  func.func @transform_5(%arg0: i32, %arg1: memref<8xi32, #tpu.memory_space<smem>>) -> (i32, i32) {
    %c0_i32 = arith.constant 0 : i32
    %c0_i32_0 = arith.constant 0 : i32
    return %c0_i32, %arg0 : i32, i32
  }
  func.func @transform_6(%arg0: i32, %arg1: memref<8xi32, #tpu.memory_space<smem>>) -> (i32, i32) {
    %c0_i32 = arith.constant 0 : i32
    %c0_i32_0 = arith.constant 0 : i32
    return %c0_i32, %arg0 : i32, i32
  }
  func.func @transform_7(%arg0: i32, %arg1: memref<8xi32, #tpu.memory_space<smem>>) -> (i32, i32) {
    %c0_i32 = arith.constant 0 : i32
    %c0_i32_0 = arith.constant 0 : i32
    %c0_i32_1 = arith.constant 0 : i32
    return %c0_i32, %c0_i32_0 : i32, i32
  }
  func.func @transform_8(%arg0: i32, %arg1: memref<8xi32, #tpu.memory_space<smem>>) -> (i32, i32) {
    %c0_i32 = arith.constant 0 : i32
    %c0_i32_0 = arith.constant 0 : i32
    %c0_i32_1 = arith.constant 0 : i32
    return %c0_i32, %c0_i32_0 : i32, i32
  }
}

</mosaic_0001>

<llo_original>
// kernel: language_decoder_forward.1
$region0: #{language_decoder_forward.1}
  #allocation0 [shape = 'u32[]', space=smem, size = 0x4, offset = 0x4, fixed_abs, tag = 'smem constant byte address 0x4 - core index']
  #allocation1 [shape = 'u32[72,128]{1,0:T(1,128)}', space=vmem, size = 0x9000, scoped, tag = 'internal scratch']
  #allocation2 [shape = 'f32[2,128,384]{2,1,0:T(8,128)}', space=vmem, size = 0x60000, scoped, tag = 'scratch operand']
  #allocation3 [shape = 'f32[8,128]{1,0:T(8,128)}', space=vmem, size = 0x1000, scoped, tag = 'scratch operand']
  #allocation4 [shape = 'bf16[8,128]{1,0:T(8,128)(2,1)}', space=vmem, size = 0x800, scoped, tag = 'scratch operand']
  #allocation5 [shape = 'f32[8,1]{1,0:T(8,128)}', space=vmem, size = 0x1000, scoped, tag = 'scratch operand']
  #allocation6 [shape = 'f32[8,1]{1,0:T(8,128)}', space=vmem, size = 0x1000, scoped, tag = 'scratch operand']
  #allocation7 [shape = 's32[2]{0}', space=sflag, size = 0x8, scoped, tag = 'scratch operand']
  #allocation8 [shape = 's32[1]{0}', space=sflag, size = 0x4, scoped, tag = 'scoped memory for language_decoder_forward.1']
  #allocation9 [shape = 'u8[512]{0}', space=smem, size = 0x200, scoped, tag = 'prefetched SMEM operand 0']
  #allocation22 [shape = 's32[]', space=sflag, size = 0x4, offset = 0, fixed_abs, tag = 'sflag constant byte address 0x0 - dummy sync flag']
  #allocation23 [shape = 's32[]', space=sflag, size = 0x4, offset = 0, fixed_abs, tag = 'sflag constant byte address 0x0 - dummy sync flag']
  #allocation24 [shape = 'u32[]', space=smem, size = 0x4, offset = 0x44, fixed_abs, tag = 'smem constant byte address 0x44 - assertion arg 0']
  #allocation25 [shape = 'u32[]', space=smem, size = 0x4, offset = 0x48, fixed_abs, tag = 'smem constant byte address 0x48 - assertion arg 1']
  #allocation26 [shape = 's32[]', space=sflag, size = 0x4, offset = 0, fixed_abs, tag = 'sflag constant byte address 0x0 - dummy sync flag']
  #allocation27 [shape = 's32[]', space=sflag, size = 0x4, offset = 0, fixed_abs, tag = 'sflag constant byte address 0x0 - dummy sync flag']
  #allocation28 [shape = 's32[]', space=sflag, size = 0x4, offset = 0, fixed_abs, tag = 'sflag constant byte address 0x0 - dummy sync flag']
  #allocation29 [shape = 's32[]', space=sflag, size = 0x4, offset = 0, fixed_abs, tag = 'sflag constant byte address 0x0 - dummy sync flag']
  #allocation30 [shape = 's32[]', space=sflag, size = 0x4, offset = 0, fixed_abs, tag = 'sflag constant byte address 0x0 - dummy sync flag']
  #allocation31 [shape = 's32[]', space=sflag, size = 0x4, offset = 0, fixed_abs, tag = 'sflag constant byte address 0x0 - dummy sync flag']
  #allocation32 [shape = 's32[]', space=sflag, size = 0x4, offset = 0, fixed_abs, tag = 'sflag constant byte address 0x0 - dummy sync flag']
  #allocation33 [shape = 's32[]', space=sflag, size = 0x4, offset = 0, fixed_abs, tag = 'sflag constant byte address 0x0 - dummy sync flag']
  #allocation34 [shape = 's32[]', space=sflag, size = 0x4, offset = 0, fixed_abs, tag = 'sflag constant byte address 0x0 - dummy sync flag']
  #allocation35 [shape = 's32[]', space=sflag, size = 0x4, offset = 0, fixed_abs, tag = 'sflag constant byte address 0x0 - dummy sync flag']
  #allocation36 [shape = 's32[]', space=sflag, size = 0x4, offset = 0, fixed_abs, tag = 'sflag constant byte address 0x0 - dummy sync flag']
  #allocation37 [shape = 's32[]', space=sflag, size = 0x4, offset = 0, fixed_abs, tag = 'sflag constant byte address 0x0 - dummy sync flag']
  #allocation38 [shape = 's32[]', space=sflag, size = 0x4, offset = 0, fixed_abs, tag = 'sflag constant byte address 0x0 - dummy sync flag']
  #allocation39 [shape = 's32[]', space=sflag, size = 0x4, offset = 0, fixed_abs, tag = 'sflag constant byte address 0x0 - dummy sync flag']
  #allocation40 [shape = 's32[]', space=sflag, size = 0x4, offset = 0, fixed_abs, tag = 'sflag constant byte address 0x0 - dummy sync flag']
  #allocation41 [shape = 's32[]', space=sflag, size = 0x4, offset = 0, fixed_abs, tag = 'sflag constant byte address 0x0 - dummy sync flag']
  %s0 = inlined_call_operand.vmem [shape: s32[8], index: 0, kind: input, shape index: {}]
  %s1 = inlined_call_operand.hbm [shape: f32[1024,128], index: 1, kind: input, shape index: {}]
  %s2 = inlined_call_operand.hbm [shape: f32[2,128,384], index: 2, kind: input, shape index: {}]
  %s3 = inlined_call_operand.hbm [shape: f32[8,128], index: 3, kind: input, shape index: {}]
  %s4 = inlined_call_operand.hbm [shape: f32[1,384], index: 4, kind: input, shape index: {}]
  %s5 = inlined_call_operand.hbm [shape: f32[1,384], index: 5, kind: input, shape index: {}]
  %s6 = inlined_call_operand.hbm [shape: bf16[128,1024], index: 6, kind: input, shape index: {}]
  %s7 = inlined_call_operand.hbm [shape: f32[1,1024], index: 7, kind: input, shape index: {}]
  %s8 = inlined_call_operand.hbm [shape: f32[8,1024], index: 8, kind: output, shape index: {0}]
  %s9 = inlined_call_operand.hbm [shape: f32[8,128], index: 9, kind: output, shape index: {1}]
  %10 = xla_tuple %s8, %s9
  %s11 = sld [smem:[#allocation0]]
  $region102: #{language_decoder_forward.1} parent=0
    _
  %s13 = ssub.s32 1, %s11
  %s14 = scalar_select 0, %s13, %s11
  %s16 = sshll.u32 %s0, 4
  %s17 = int_to_ptr.vmem [resolvable:$true] %s16
  %19 = dma.vmem_to_smem %s17, 16, [#allocation9], [#allocation8]
  %21 = dma.done [#allocation8], 16
  %22 = sfence
  $region1: #{language_decoder_forward.1} parent=0
    #allocation10 [shape = 'u8[4096]{0}', space=vmem, size = 0x1000, scoped, tag = 'input window, operand 3, single buffered']
    #allocation11 [shape = 's32[1]{0}', space=sflag, size = 0x4, scoped, tag = 'scoped memory for language_decoder_forward.1']
    #allocation12 [shape = 's32[1]{0}', space=sflag, size = 0x4, scoped, tag = 'scoped memory for language_decoder_forward.1']
    #allocation13 [shape = 'u8[1536]{0}', space=vmem, size = 0x800, scoped, tag = 'input window, operand 4, single buffered']
    #allocation14 [shape = 's32[1]{0}', space=sflag, size = 0x4, scoped, tag = 'scoped memory for language_decoder_forward.1']
    #allocation15 [shape = 'u8[1536]{0}', space=vmem, size = 0x800, scoped, tag = 'input window, operand 5, single buffered']
    #allocation16 [shape = 'u8[262144]{0}', space=vmem, size = 0x40000, scoped, tag = 'input window, operand 6, single buffered']
    #allocation17 [shape = 's32[1]{0}', space=sflag, size = 0x4, scoped, tag = 'scoped memory for language_decoder_forward.1']
    #allocation18 [shape = 'u8[4096]{0}', space=vmem, size = 0x1000, scoped, tag = 'input window, operand 7, single buffered']
    #allocation19 [shape = 'u8[32768]{0}', space=vmem, size = 0x8000, scoped, tag = 'output window, operand 0, single buffered']
    #allocation20 [shape = 'u8[4096]{0}', space=vmem, size = 0x1000, scoped, tag = 'output window, operand 1, single buffered']
    #allocation21 [shape = 's32[1]{0}', space=sflag, size = 0x4, scoped, tag = 'scoped memory for language_decoder_forward.1']
    %23 = vsyncpa [#allocation11], 0
    %24 = vsyncpa [#allocation14], 0
    %25 = vsyncpa [#allocation17], 0
    %26 = vsyncpa [#allocation12], 0
    %27 = vsyncpa [#allocation21], 0
    // Predicated region
    $region2: #{language_decoder_forward.1} parent=1 // pred_check
      _
    $region3: #{language_decoder_forward.1} parent=1 // pred_check_branch
      %29 = sbr.rel (0) target = $region5
    $region4: #{language_decoder_forward.1} parent=1 // pred_region
      %31 = vsyncadd [#allocation11], 0
      %s33 = sshll.u32 %s3, 4
      %s34 = int_to_ptr.hbm [resolvable:$true] %s33
      %s35 = sshll.u32 [#allocation10], 4
      %s36 = int_to_ptr.vmem [resolvable:$true] %s35
      %38 = dma.hbm_to_vmem [thread:$0]  %s34, 128, %s36, [#allocation11]
    $region5: #{language_decoder_forward.1} parent=1 // pred_fallthru
      _
    // Predicated region
    $region6: #{language_decoder_forward.1} parent=1 // pred_check
      _
    $region7: #{language_decoder_forward.1} parent=1 // pred_check_branch
      %40 = sbr.rel (0) target = $region9
    $region8: #{language_decoder_forward.1} parent=1 // pred_region
      %42 = vsyncadd [#allocation14], 0
      %s44 = sshll.u32 %s4, 4
      %s45 = int_to_ptr.hbm [resolvable:$true] %s44
      %s46 = sshll.u32 [#allocation13], 4
      %s47 = int_to_ptr.vmem [resolvable:$true] %s46
      %49 = dma.hbm_to_vmem [thread:$0]  %s45, 48, %s47, [#allocation14]
    $region9: #{language_decoder_forward.1} parent=1 // pred_fallthru
      _
    // Predicated region
    $region10: #{language_decoder_forward.1} parent=1 // pred_check
      _
    $region11: #{language_decoder_forward.1} parent=1 // pred_check_branch
      %51 = sbr.rel (0) target = $region13
    $region12: #{language_decoder_forward.1} parent=1 // pred_region
      %53 = vsyncadd [#allocation14], 0
      %s55 = sshll.u32 %s5, 4
      %s56 = int_to_ptr.hbm [resolvable:$true] %s55
      %s57 = sshll.u32 [#allocation15], 4
      %s58 = int_to_ptr.vmem [resolvable:$true] %s57
      %60 = dma.hbm_to_vmem [thread:$0]  %s56, 48, %s58, [#allocation14]
    $region13: #{language_decoder_forward.1} parent=1 // pred_fallthru
      _
    // Predicated region
    $region14: #{language_decoder_forward.1} parent=1 // pred_check
      _
    $region15: #{language_decoder_forward.1} parent=1 // pred_check_branch
      %62 = sbr.rel (0) target = $region17
    $region16: #{language_decoder_forward.1} parent=1 // pred_region
      %64 = vsyncadd [#allocation17], 0
      %s65 = sshll.u32 %s6, 4
      %s66 = int_to_ptr.hbm [resolvable:$true] %s65
      %s67 = sshll.u32 [#allocation16], 4
      %s68 = int_to_ptr.vmem [resolvable:$true] %s67
      %73 = dma.hbm_to_vmem [thread:$0]  %s66, 8192, %s68, [#allocation17], 512, 512, 32
    $region17: #{language_decoder_forward.1} parent=1 // pred_fallthru
      _
    // Predicated region
    $region18: #{language_decoder_forward.1} parent=1 // pred_check
      _
    $region19: #{language_decoder_forward.1} parent=1 // pred_check_branch
      %75 = sbr.rel (0) target = $region21
    $region20: #{language_decoder_forward.1} parent=1 // pred_region
      %77 = vsyncadd [#allocation17], 0
      %s79 = sshll.u32 %s7, 4
      %s80 = int_to_ptr.hbm [resolvable:$true] %s79
      %s81 = sshll.u32 [#allocation18], 4
      %s82 = int_to_ptr.vmem [resolvable:$true] %s81
      %84 = dma.hbm_to_vmem [thread:$0]  %s80, 128, %s82, [#allocation17]
    $region21: #{language_decoder_forward.1} parent=1 // pred_fallthru
      _
    // Predicated region
    $region22: #{language_decoder_forward.1} parent=1 // pred_check
      _
    $region23: #{language_decoder_forward.1} parent=1 // pred_check_branch
      %86 = sbr.rel (0) target = $region25
    $region24: #{language_decoder_forward.1} parent=1 // pred_region
      %88 = dma.done [#allocation11], 128
    $region25: #{language_decoder_forward.1} parent=1 // pred_fallthru
      _
    // Predicated region
    $region26: #{language_decoder_forward.1} parent=1 // pred_check
      _
    $region27: #{language_decoder_forward.1} parent=1 // pred_check_branch
      %90 = sbr.rel (0) target = $region29
    $region28: #{language_decoder_forward.1} parent=1 // pred_region
      %92 = dma.done [#allocation14], 48
    $region29: #{language_decoder_forward.1} parent=1 // pred_fallthru
      _
    // Predicated region
    $region30: #{language_decoder_forward.1} parent=1 // pred_check
      _
    $region31: #{language_decoder_forward.1} parent=1 // pred_check_branch
      %94 = sbr.rel (0) target = $region33
    $region32: #{language_decoder_forward.1} parent=1 // pred_region
      %96 = dma.done [#allocation14], 48
    $region33: #{language_decoder_forward.1} parent=1 // pred_fallthru
      _
    // Predicated region
    $region34: #{language_decoder_forward.1} parent=1 // pred_check
      _
    $region35: #{language_decoder_forward.1} parent=1 // pred_check_branch
      %98 = sbr.rel (0) target = $region37
    $region36: #{language_decoder_forward.1} parent=1 // pred_region
      %100 = dma.done [#allocation17], 8192
    $region37: #{language_decoder_forward.1} parent=1 // pred_fallthru
      _
    // Predicated region
    $region38: #{language_decoder_forward.1} parent=1 // pred_check
      _
    $region39: #{language_decoder_forward.1} parent=1 // pred_check_branch
      %102 = sbr.rel (0) target = $region41
    $region40: #{language_decoder_forward.1} parent=1 // pred_region
      %104 = dma.done [#allocation17], 128
    $region41: #{language_decoder_forward.1} parent=1 // pred_fallthru
      _
    %p105 = scmp.eq.s32.totalorder 0, 0
    // Predicated region
    $region42: #{language_decoder_forward.1} parent=1 // pred_check
      %p106 = pneg %p105
    $region43: #{language_decoder_forward.1} parent=1 // pred_check_branch
      %108 = sbr.rel (%p106) target = $region45
    $region44: #{language_decoder_forward.1} parent=1 // pred_region
      // Predicated region
      $region46: #{language_decoder_forward.1} parent=44 // pred_check
        _
      $region47: #{language_decoder_forward.1} parent=44 // pred_check_branch
        %110 = sbr.rel target = $region49
      $region48: #{language_decoder_forward.1} parent=44 // pred_region
        %111 = sst [smem:[#allocation24]] [#allocation23]
        %112 = sst [smem:[#allocation25]] [#allocation22]
      $region49: #{language_decoder_forward.1} parent=44 // pred_fallthru
        _
      %114 = shalt.err (0)
      %s116 = sshll.u32 %s2, 4
      %s117 = int_to_ptr.hbm [resolvable:$true] %s116
      %s118 = sshll.u32 [#allocation2], 4
      %s119 = int_to_ptr.vmem [resolvable:$true] %s118
      %121 = dma.hbm_to_vmem [thread:$0]  %s117, 12288, %s119, [#allocation7]
      %s122 = sld [smem:[#allocation9]]
      %s123 = scalar_lea.hbm %s1, %s122
      %s124 = scalar_lea.sflag [#allocation7], 1
      // Predicated region
      $region50: #{language_decoder_forward.1} parent=44 // pred_check
        _
      $region51: #{language_decoder_forward.1} parent=44 // pred_check_branch
        %126 = sbr.rel target = $region53
      $region52: #{language_decoder_forward.1} parent=44 // pred_region
        %127 = sst [smem:[#allocation24]] [#allocation27]
        %128 = sst [smem:[#allocation25]] [#allocation26]
      $region53: #{language_decoder_forward.1} parent=44 // pred_fallthru
        _
      %130 = shalt.err (0)
      %s132 = sshll.u32 %s123, 4
      %s133 = int_to_ptr.hbm [resolvable:$true] %s132
      %s134 = sshll.u32 [#allocation3], 4
      %s135 = int_to_ptr.vmem [resolvable:$true] %s134
      %137 = dma.hbm_to_vmem [thread:$0]  %s133, 16, %s135, %s124
      %s138 = sld [smem:[#allocation9 + $0x1]]
      %s139 = scalar_lea.hbm %s1, %s138
      %s140 = scalar_lea.vmem [#allocation3], 1
      // Predicated region
      $region54: #{language_decoder_forward.1} parent=44 // pred_check
        _
      $region55: #{language_decoder_forward.1} parent=44 // pred_check_branch
        %142 = sbr.rel target = $region57
      $region56: #{language_decoder_forward.1} parent=44 // pred_region
        %143 = sst [smem:[#allocation24]] [#allocation29]
        %144 = sst [smem:[#allocation25]] [#allocation28]
      $region57: #{language_decoder_forward.1} parent=44 // pred_fallthru
        _
      %146 = shalt.err (0)
      %s148 = sshll.u32 %s139, 4
      %s149 = int_to_ptr.hbm [resolvable:$true] %s148
      %s150 = sshll.u32 %s140, 4
      %s151 = int_to_ptr.vmem [resolvable:$true] %s150
      %153 = dma.hbm_to_vmem [thread:$0]  %s149, 16, %s151, %s124
      %s154 = sld [smem:[#allocation9 + $0x2]]
      %s155 = scalar_lea.hbm %s1, %s154
      %s156 = scalar_lea.vmem [#allocation3], 2
      // Predicated region
      $region58: #{language_decoder_forward.1} parent=44 // pred_check
        _
      $region59: #{language_decoder_forward.1} parent=44 // pred_check_branch
        %158 = sbr.rel target = $region61
      $region60: #{language_decoder_forward.1} parent=44 // pred_region
        %159 = sst [smem:[#allocation24]] [#allocation31]
        %160 = sst [smem:[#allocation25]] [#allocation30]
      $region61: #{language_decoder_forward.1} parent=44 // pred_fallthru
        _
      %162 = shalt.err (0)
      %s164 = sshll.u32 %s155, 4
      %s165 = int_to_ptr.hbm [resolvable:$true] %s164
      %s166 = sshll.u32 %s156, 4
      %s167 = int_to_ptr.vmem [resolvable:$true] %s166
      %169 = dma.hbm_to_vmem [thread:$0]  %s165, 16, %s167, %s124
      %s170 = sld [smem:[#allocation9 + $0x3]]
      %s171 = scalar_lea.hbm %s1, %s170
      %s172 = scalar_lea.vmem [#allocation3], 3
      // Predicated region
      $region62: #{language_decoder_forward.1} parent=44 // pred_check
        _
      $region63: #{language_decoder_forward.1} parent=44 // pred_check_branch
        %174 = sbr.rel target = $region65
      $region64: #{language_decoder_forward.1} parent=44 // pred_region
        %175 = sst [smem:[#allocation24]] [#allocation33]
        %176 = sst [smem:[#allocation25]] [#allocation32]
      $region65: #{language_decoder_forward.1} parent=44 // pred_fallthru
        _
      %178 = shalt.err (0)
      %s180 = sshll.u32 %s171, 4
      %s181 = int_to_ptr.hbm [resolvable:$true] %s180
      %s182 = sshll.u32 %s172, 4
      %s183 = int_to_ptr.vmem [resolvable:$true] %s182
      %185 = dma.hbm_to_vmem [thread:$0]  %s181, 16, %s183, %s124
      %s186 = sld [smem:[#allocation9 + $0x4]]
      %s187 = scalar_lea.hbm %s1, %s186
      %s188 = scalar_lea.vmem [#allocation3], 4
      // Predicated region
      $region66: #{language_decoder_forward.1} parent=44 // pred_check
        _
      $region67: #{language_decoder_forward.1} parent=44 // pred_check_branch
        %190 = sbr.rel target = $region69
      $region68: #{language_decoder_forward.1} parent=44 // pred_region
        %191 = sst [smem:[#allocation24]] [#allocation35]
        %192 = sst [smem:[#allocation25]] [#allocation34]
      $region69: #{language_decoder_forward.1} parent=44 // pred_fallthru
        _
      %194 = shalt.err (0)
      %s196 = sshll.u32 %s187, 4
      %s197 = int_to_ptr.hbm [resolvable:$true] %s196
      %s198 = sshll.u32 %s188, 4
      %s199 = int_to_ptr.vmem [resolvable:$true] %s198
      %201 = dma.hbm_to_vmem [thread:$0]  %s197, 16, %s199, %s124
      %s202 = sld [smem:[#allocation9 + $0x5]]
      %s203 = scalar_lea.hbm %s1, %s202
      %s204 = scalar_lea.vmem [#allocation3], 5
      // Predicated region
      $region70: #{language_decoder_forward.1} parent=44 // pred_check
        _
      $region71: #{language_decoder_forward.1} parent=44 // pred_check_branch
        %206 = sbr.rel target = $region73
      $region72: #{language_decoder_forward.1} parent=44 // pred_region
        %207 = sst [smem:[#allocation24]] [#allocation37]
        %208 = sst [smem:[#allocation25]] [#allocation36]
      $region73: #{language_decoder_forward.1} parent=44 // pred_fallthru
        _
      %210 = shalt.err (0)
      %s212 = sshll.u32 %s203, 4
      %s213 = int_to_ptr.hbm [resolvable:$true] %s212
      %s214 = sshll.u32 %s204, 4
      %s215 = int_to_ptr.vmem [resolvable:$true] %s214
      %217 = dma.hbm_to_vmem [thread:$0]  %s213, 16, %s215, %s124
      %s218 = sld [smem:[#allocation9 + $0x6]]
      %s219 = scalar_lea.hbm %s1, %s218
      %s220 = scalar_lea.vmem [#allocation3], 6
      // Predicated region
      $region74: #{language_decoder_forward.1} parent=44 // pred_check
        _
      $region75: #{language_decoder_forward.1} parent=44 // pred_check_branch
        %222 = sbr.rel target = $region77
      $region76: #{language_decoder_forward.1} parent=44 // pred_region
        %223 = sst [smem:[#allocation24]] [#allocation39]
        %224 = sst [smem:[#allocation25]] [#allocation38]
      $region77: #{language_decoder_forward.1} parent=44 // pred_fallthru
        _
      %226 = shalt.err (0)
      %s228 = sshll.u32 %s219, 4
      %s229 = int_to_ptr.hbm [resolvable:$true] %s228
      %s230 = sshll.u32 %s220, 4
      %s231 = int_to_ptr.vmem [resolvable:$true] %s230
      %233 = dma.hbm_to_vmem [thread:$0]  %s229, 16, %s231, %s124
      %s234 = sld [smem:[#allocation9 + $0x7]]
      %s235 = scalar_lea.hbm %s1, %s234
      %s236 = scalar_lea.vmem [#allocation3], 7
      // Predicated region
      $region78: #{language_decoder_forward.1} parent=44 // pred_check
        _
      $region79: #{language_decoder_forward.1} parent=44 // pred_check_branch
        %238 = sbr.rel target = $region81
      $region80: #{language_decoder_forward.1} parent=44 // pred_region
        %239 = sst [smem:[#allocation24]] [#allocation41]
        %240 = sst [smem:[#allocation25]] [#allocation40]
      $region81: #{language_decoder_forward.1} parent=44 // pred_fallthru
        _
      %242 = shalt.err (0)
      %s244 = sshll.u32 %s235, 4
      %s245 = int_to_ptr.hbm [resolvable:$true] %s244
      %s246 = sshll.u32 %s236, 4
      %s247 = int_to_ptr.vmem [resolvable:$true] %s246
      %249 = dma.hbm_to_vmem [thread:$0]  %s245, 16, %s247, %s124
      %s250 = smul.u32 1, 1
      %s251 = sshll.u32 %s250, 4
      %252 = dma.done %s124, %s251
      %s253 = sshll.u32 %s250, 4
      %254 = dma.done %s124, %s253
      %s255 = sshll.u32 %s250, 4
      %256 = dma.done %s124, %s255
      %s257 = sshll.u32 %s250, 4
      %258 = dma.done %s124, %s257
      %s259 = sshll.u32 %s250, 4
      %260 = dma.done %s124, %s259
      %s261 = sshll.u32 %s250, 4
      %262 = dma.done %s124, %s261
      %s263 = sshll.u32 %s250, 4
      %264 = dma.done %s124, %s263
      %s265 = sshll.u32 %s250, 4
      %266 = dma.done %s124, %s265
      %s267 = smul.u32 8, 2
      %s268 = smul.u32 %s267, 16
      %s269 = smul.u32 %s268, 3
      %s270 = sshll.u32 %s269, 4
      %271 = dma.done [#allocation7], %s270
      %v272 = vld [vmem:[#allocation3] sm:$0xff]
      %v273 = vmax.f32 %v272, 0.0
      %v274 = vld [vmem:[#allocation10] sm:$0xff]
      %v275 = vld [vmem:[#allocation2] sm:$0xff]
      %v276 = vld [vmem:[#allocation2 + $0x8] sm:$0xff]
      %v277 = vld [vmem:[#allocation2 + $0x10] sm:$0xff]
      %v278 = vld [vmem:[#allocation2 + $0x18] sm:$0xff]
      %v279 = vld [vmem:[#allocation2 + $0x20] sm:$0xff]
      %v280 = vld [vmem:[#allocation2 + $0x28] sm:$0xff]
      %v281 = vld [vmem:[#allocation2 + $0x30] sm:$0xff]
      %v282 = vld [vmem:[#allocation2 + $0x38] sm:$0xff]
      %v283 = vld [vmem:[#allocation2 + $0x40] sm:$0xff]
      %v284 = vld [vmem:[#allocation2 + $0x48] sm:$0xff]
      %v285 = vld [vmem:[#allocation2 + $0x50] sm:$0xff]
      %v286 = vld [vmem:[#allocation2 + $0x58] sm:$0xff]
      %v287 = vld [vmem:[#allocation2 + $0x60] sm:$0xff]
      %v288 = vld [vmem:[#allocation2 + $0x68] sm:$0xff]
      %v289 = vld [vmem:[#allocation2 + $0x70] sm:$0xff]
      %v290 = vld [vmem:[#allocation2 + $0x78] sm:$0xff]
      %v291 = vld [vmem:[#allocation2 + $0x80] sm:$0xff]
      %v292 = vld [vmem:[#allocation2 + $0x88] sm:$0xff]
      %v293 = vld [vmem:[#allocation2 + $0x90] sm:$0xff]
      %v294 = vld [vmem:[#allocation2 + $0x98] sm:$0xff]
      %v295 = vld [vmem:[#allocation2 + $0xa0] sm:$0xff]
      %v296 = vld [vmem:[#allocation2 + $0xa8] sm:$0xff]
      %v297 = vld [vmem:[#allocation2 + $0xb0] sm:$0xff]
      %v298 = vld [vmem:[#allocation2 + $0xb8] sm:$0xff]
      %v299 = vld [vmem:[#allocation2 + $0xc0] sm:$0xff]
      %v300 = vld [vmem:[#allocation2 + $0xc8] sm:$0xff]
      %v301 = vld [vmem:[#allocation2 + $0xd0] sm:$0xff]
      %v302 = vld [vmem:[#allocation2 + $0xd8] sm:$0xff]
      %v303 = vld [vmem:[#allocation2 + $0xe0] sm:$0xff]
      %v304 = vld [vmem:[#allocation2 + $0xe8] sm:$0xff]
      %v305 = vld [vmem:[#allocation2 + $0xf0] sm:$0xff]
      %v306 = vld [vmem:[#allocation2 + $0xf8] sm:$0xff]
      %v307 = vld [vmem:[#allocation2 + $0x100] sm:$0xff]
      %v308 = vld [vmem:[#allocation2 + $0x108] sm:$0xff]
      %v309 = vld [vmem:[#allocation2 + $0x110] sm:$0xff]
      %v310 = vld [vmem:[#allocation2 + $0x118] sm:$0xff]
      %v311 = vld [vmem:[#allocation2 + $0x120] sm:$0xff]
      %v312 = vld [vmem:[#allocation2 + $0x128] sm:$0xff]
      %v313 = vld [vmem:[#allocation2 + $0x130] sm:$0xff]
      %v314 = vld [vmem:[#allocation2 + $0x138] sm:$0xff]
      %v315 = vld [vmem:[#allocation2 + $0x140] sm:$0xff]
      %v316 = vld [vmem:[#allocation2 + $0x148] sm:$0xff]
      %v317 = vld [vmem:[#allocation2 + $0x150] sm:$0xff]
      %v318 = vld [vmem:[#allocation2 + $0x158] sm:$0xff]
      %v319 = vld [vmem:[#allocation2 + $0x160] sm:$0xff]
      %v320 = vld [vmem:[#allocation2 + $0x168] sm:$0xff]
      %v321 = vld [vmem:[#allocation2 + $0x170] sm:$0xff]
      %v322 = vld [vmem:[#allocation2 + $0x178] sm:$0xff]
      %v323 = vld [vmem:[#allocation13] sm:$0x7]
      %v325 = vperm.slane %v323, 0
      %v326 = vperm.slane %v323, 1
      %v327 = vperm.slane %v323, 2
      %331 = vmatpush.msra.mxu0 %v320
      %332 = vmatpush.msra.mxu0 %v317
      %333 = vmatpush.msra.mxu0 %v314
      %334 = vmatpush.msra.mxu0 %v311
      %335 = vmatpush.msra.mxu0 %v308
      %336 = vmatpush.msra.mxu0 %v305
      %337 = vmatpush.msra.mxu0 %v302
      %338 = vmatpush.msra.mxu0 %v299
      %339 = vmatpush.msra.mxu0 %v296
      %340 = vmatpush.msra.mxu0 %v293
      %341 = vmatpush.msra.mxu0 %v290
      %342 = vmatpush.msra.mxu0 %v287
      %343 = vmatpush.msra.mxu0 %v284
      %344 = vmatpush.msra.mxu0 %v281
      %345 = vmatpush.msra.mxu0 %v278
      %346 = vmatpush.msra.mxu0 %v275
      %347 = vmatmul.f32.gmra.mxu0 %v273
      %v348 = vpop.f32.mrf.mxu0
      %v349 = vadd.f32 %v325, %v348
      %350 = vdwg.mxu0
      %351 = vmatpush.msra.mxu0 %v321
      %352 = vmatpush.msra.mxu0 %v318
      %353 = vmatpush.msra.mxu0 %v315
      %354 = vmatpush.msra.mxu0 %v312
      %355 = vmatpush.msra.mxu0 %v309
      %356 = vmatpush.msra.mxu0 %v306
      %357 = vmatpush.msra.mxu0 %v303
      %358 = vmatpush.msra.mxu0 %v300
      %359 = vmatpush.msra.mxu0 %v297
      %360 = vmatpush.msra.mxu0 %v294
      %361 = vmatpush.msra.mxu0 %v291
      %362 = vmatpush.msra.mxu0 %v288
      %363 = vmatpush.msra.mxu0 %v285
      %364 = vmatpush.msra.mxu0 %v282
      %365 = vmatpush.msra.mxu0 %v279
      %366 = vmatpush.msra.mxu0 %v276
      %367 = vmatmul.f32.gmra.mxu0 %v273
      %v368 = vpop.f32.mrf.mxu0
      %v369 = vadd.f32 %v326, %v368
      %370 = vdwg.mxu0
      %371 = vmatpush.msra.mxu0 %v322
      %372 = vmatpush.msra.mxu0 %v319
      %373 = vmatpush.msra.mxu0 %v316
      %374 = vmatpush.msra.mxu0 %v313
      %375 = vmatpush.msra.mxu0 %v310
      %376 = vmatpush.msra.mxu0 %v307
      %377 = vmatpush.msra.mxu0 %v304
      %378 = vmatpush.msra.mxu0 %v301
      %379 = vmatpush.msra.mxu0 %v298
      %380 = vmatpush.msra.mxu0 %v295
      %381 = vmatpush.msra.mxu0 %v292
      %382 = vmatpush.msra.mxu0 %v289
      %383 = vmatpush.msra.mxu0 %v286
      %384 = vmatpush.msra.mxu0 %v283
      %385 = vmatpush.msra.mxu0 %v280
      %386 = vmatpush.msra.mxu0 %v277
      %387 = vmatmul.f32.gmra.mxu0 %v273
      %v388 = vpop.f32.mrf.mxu0
      %v389 = vadd.f32 %v327, %v388
      %390 = vdwg.mxu0
      %s391 = scalar_lea.vmem [#allocation2], 384
      %v392 = vld [vmem:[%s391] sm:$0xff]
      %v393 = vld [vmem:[%s391 + $0x8] sm:$0xff]
      %v394 = vld [vmem:[%s391 + $0x10] sm:$0xff]
      %v395 = vld [vmem:[%s391 + $0x18] sm:$0xff]
      %v396 = vld [vmem:[%s391 + $0x20] sm:$0xff]
      %v397 = vld [vmem:[%s391 + $0x28] sm:$0xff]
      %v398 = vld [vmem:[%s391 + $0x30] sm:$0xff]
      %v399 = vld [vmem:[%s391 + $0x38] sm:$0xff]
      %v400 = vld [vmem:[%s391 + $0x40] sm:$0xff]
      %v401 = vld [vmem:[%s391 + $0x48] sm:$0xff]
      %v402 = vld [vmem:[%s391 + $0x50] sm:$0xff]
      %v403 = vld [vmem:[%s391 + $0x58] sm:$0xff]
      %v404 = vld [vmem:[%s391 + $0x60] sm:$0xff]
      %v405 = vld [vmem:[%s391 + $0x68] sm:$0xff]
      %v406 = vld [vmem:[%s391 + $0x70] sm:$0xff]
      %v407 = vld [vmem:[%s391 + $0x78] sm:$0xff]
      %v408 = vld [vmem:[%s391 + $0x80] sm:$0xff]
      %v409 = vld [vmem:[%s391 + $0x88] sm:$0xff]
      %v410 = vld [vmem:[%s391 + $0x90] sm:$0xff]
      %v411 = vld [vmem:[%s391 + $0x98] sm:$0xff]
      %v412 = vld [vmem:[%s391 + $0xa0] sm:$0xff]
      %v413 = vld [vmem:[%s391 + $0xa8] sm:$0xff]
      %v414 = vld [vmem:[%s391 + $0xb0] sm:$0xff]
      %v415 = vld [vmem:[%s391 + $0xb8] sm:$0xff]
      %v416 = vld [vmem:[%s391 + $0xc0] sm:$0xff]
      %v417 = vld [vmem:[%s391 + $0xc8] sm:$0xff]
      %v418 = vld [vmem:[%s391 + $0xd0] sm:$0xff]
      %v419 = vld [vmem:[%s391 + $0xd8] sm:$0xff]
      %v420 = vld [vmem:[%s391 + $0xe0] sm:$0xff]
      %v421 = vld [vmem:[%s391 + $0xe8] sm:$0xff]
      %v422 = vld [vmem:[%s391 + $0xf0] sm:$0xff]
      %v423 = vld [vmem:[%s391 + $0xf8] sm:$0xff]
      %v424 = vld [vmem:[%s391 + $0x100] sm:$0xff]
      %v425 = vld [vmem:[%s391 + $0x108] sm:$0xff]
      %v426 = vld [vmem:[%s391 + $0x110] sm:$0xff]
      %v427 = vld [vmem:[%s391 + $0x118] sm:$0xff]
      %v428 = vld [vmem:[%s391 + $0x120] sm:$0xff]
      %v429 = vld [vmem:[%s391 + $0x128] sm:$0xff]
      %v430 = vld [vmem:[%s391 + $0x130] sm:$0xff]
      %v431 = vld [vmem:[%s391 + $0x138] sm:$0xff]
      %v432 = vld [vmem:[%s391 + $0x140] sm:$0xff]
      %v433 = vld [vmem:[%s391 + $0x148] sm:$0xff]
      %v434 = vld [vmem:[%s391 + $0x150] sm:$0xff]
      %v435 = vld [vmem:[%s391 + $0x158] sm:$0xff]
      %v436 = vld [vmem:[%s391 + $0x160] sm:$0xff]
      %v437 = vld [vmem:[%s391 + $0x168] sm:$0xff]
      %v438 = vld [vmem:[%s391 + $0x170] sm:$0xff]
      %v439 = vld [vmem:[%s391 + $0x178] sm:$0xff]
      %v440 = vld [vmem:[#allocation15] sm:$0x7]
      %v442 = vperm.slane %v440, 0
      %v443 = vperm.slane %v440, 1
      %v444 = vperm.slane %v440, 2
      %448 = vmatpush.msra.mxu0 %v437
      %449 = vmatpush.msra.mxu0 %v434
      %450 = vmatpush.msra.mxu0 %v431
      %451 = vmatpush.msra.mxu0 %v428
      %452 = vmatpush.msra.mxu0 %v425
      %453 = vmatpush.msra.mxu0 %v422
      %454 = vmatpush.msra.mxu0 %v419
      %455 = vmatpush.msra.mxu0 %v416
      %456 = vmatpush.msra.mxu0 %v413
      %457 = vmatpush.msra.mxu0 %v410
      %458 = vmatpush.msra.mxu0 %v407
      %459 = vmatpush.msra.mxu0 %v404
      %460 = vmatpush.msra.mxu0 %v401
      %461 = vmatpush.msra.mxu0 %v398
      %462 = vmatpush.msra.mxu0 %v395
      %463 = vmatpush.msra.mxu0 %v392
      %464 = vmatmul.f32.gmra.mxu0 %v274
      %v465 = vpop.f32.mrf.mxu0
      %v466 = vadd.f32 %v442, %v465
      %467 = vdwg.mxu0
      %468 = vmatpush.msra.mxu0 %v438
      %469 = vmatpush.msra.mxu0 %v435
      %470 = vmatpush.msra.mxu0 %v432
      %471 = vmatpush.msra.mxu0 %v429
      %472 = vmatpush.msra.mxu0 %v426
      %473 = vmatpush.msra.mxu0 %v423
      %474 = vmatpush.msra.mxu0 %v420
      %475 = vmatpush.msra.mxu0 %v417
      %476 = vmatpush.msra.mxu0 %v414
      %477 = vmatpush.msra.mxu0 %v411
      %478 = vmatpush.msra.mxu0 %v408
      %479 = vmatpush.msra.mxu0 %v405
      %480 = vmatpush.msra.mxu0 %v402
      %481 = vmatpush.msra.mxu0 %v399
      %482 = vmatpush.msra.mxu0 %v396
      %483 = vmatpush.msra.mxu0 %v393
      %484 = vmatmul.f32.gmra.mxu0 %v274
      %v485 = vpop.f32.mrf.mxu0
      %v486 = vadd.f32 %v443, %v485
      %487 = vdwg.mxu0
      %488 = vmatpush.msra.mxu0 %v439
      %489 = vmatpush.msra.mxu0 %v436
      %490 = vmatpush.msra.mxu0 %v433
      %491 = vmatpush.msra.mxu0 %v430
      %492 = vmatpush.msra.mxu0 %v427
      %493 = vmatpush.msra.mxu0 %v424
      %494 = vmatpush.msra.mxu0 %v421
      %495 = vmatpush.msra.mxu0 %v418
      %496 = vmatpush.msra.mxu0 %v415
      %497 = vmatpush.msra.mxu0 %v412
      %498 = vmatpush.msra.mxu0 %v409
      %499 = vmatpush.msra.mxu0 %v406
      %500 = vmatpush.msra.mxu0 %v403
      %501 = vmatpush.msra.mxu0 %v400
      %502 = vmatpush.msra.mxu0 %v397
      %503 = vmatpush.msra.mxu0 %v394
      %504 = vmatmul.f32.gmra.mxu0 %v274
      %v505 = vpop.f32.mrf.mxu0
      %v506 = vadd.f32 %v444, %v505
      %507 = vdwg.mxu0
      %v508 = vadd.f32 %v349, %v466
      %v509 = vxor.u32 %v508, 2147483648
      %v510 = vmul.f32 %v509, 1.442695
      %v511 = vpow.pop %v510
      %v512 = vadd.f32 %v511, 1.0
      %v513 = vrcp.pop %v512
      %v514 = vmul.f32 %v512, %v513
      %v515 = vsub.f32 1.0, %v514
      %v516 = vmul.f32 %v513, %v515
      %v517 = vadd.f32 %v513, %v516
      %vm518 = vweird.f32 %v512
      %vm519 = vweird.f32 %v513
      %vm520 = vmor %vm518, %vm519
      %v521 = vsel %vm520, %v513, %v517
      %v522 = vand.u32 2147483647, %v512
      %vm523 = vcmp.eq.f32.partialorder %v522, 8.507059e+37
      %v524 = vand.u32 %v512, 2147483648
      %v525 = vor.u32 1.1754944e-38, %v524
      %v526 = vsel %vm523, %v525, %v521
      %v527 = vmul.f32 1.0, %v526
      %v528 = vadd.f32 %v369, %v486
      %v529 = vxor.u32 %v528, 2147483648
      %v530 = vmul.f32 %v529, 1.442695
      %v531 = vpow.pop %v530
      %v532 = vadd.f32 %v531, 1.0
      %v533 = vrcp.pop %v532
      %v534 = vmul.f32 %v532, %v533
      %v535 = vsub.f32 1.0, %v534
      %v536 = vmul.f32 %v533, %v535
      %v537 = vadd.f32 %v533, %v536
      %vm538 = vweird.f32 %v532
      %vm539 = vweird.f32 %v533
      %vm540 = vmor %vm538, %vm539
      %v541 = vsel %vm540, %v533, %v537
      %v542 = vand.u32 2147483647, %v532
      %vm543 = vcmp.eq.f32.partialorder %v542, 8.507059e+37
      %v544 = vand.u32 %v532, 2147483648
      %v545 = vor.u32 1.1754944e-38, %v544
      %v546 = vsel %vm543, %v545, %v541
      %v547 = vmul.f32 1.0, %v546
      %v548 = vmul.f32 %v527, %v506
      %v549 = vadd.f32 %v389, %v548
      %v550 = vtanh.pop %v549
      %v551 = vsub.f32 1.0, %v547
      %v552 = vmul.f32 %v551, %v550
      %v553 = vmul.f32 %v547, %v274
      %v554 = vadd.f32 %v552, %v553
      %555 = vst [vmem:[#allocation20] sm:$0xff] %v554
      %v556 = vpack.c.bf16 %v554, %v554
      %557 = vst [vmem:[#allocation4] sm:$0xf] %v556
      %vm558 = vcmask 7168
      %559 = vst.msk [vmem:[#allocation5] sm:$0xff] %vm558, -inf
      %560 = vst.msk [vmem:[#allocation6] sm:$0xff] %vm558, 0.0
    $region45: #{language_decoder_forward.1} parent=1 // pred_fallthru
      _
    %v561 = vld [vmem:[#allocation4] sm:$0xf]
    %v562 = vld [vmem:[#allocation16] sm:$0xff]
    %v563 = vld [vmem:[#allocation16 + $0x8] sm:$0xff]
    %v564 = vld [vmem:[#allocation16 + $0x10] sm:$0xff]
    %v565 = vld [vmem:[#allocation16 + $0x18] sm:$0xff]
    %v566 = vld [vmem:[#allocation16 + $0x20] sm:$0xff]
    %v567 = vld [vmem:[#allocation16 + $0x28] sm:$0xff]
    %v568 = vld [vmem:[#allocation16 + $0x30] sm:$0xff]
    %v569 = vld [vmem:[#allocation16 + $0x38] sm:$0xff]
    %v570 = vld [vmem:[#allocation16 + $0x40] sm:$0xff]
    %v571 = vld [vmem:[#allocation16 + $0x48] sm:$0xff]
    %v572 = vld [vmem:[#allocation16 + $0x50] sm:$0xff]
    %v573 = vld [vmem:[#allocation16 + $0x58] sm:$0xff]
    %v574 = vld [vmem:[#allocation16 + $0x60] sm:$0xff]
    %v575 = vld [vmem:[#allocation16 + $0x68] sm:$0xff]
    %v576 = vld [vmem:[#allocation16 + $0x70] sm:$0xff]
    %v577 = vld [vmem:[#allocation16 + $0x78] sm:$0xff]
    %v578 = vld [vmem:[#allocation16 + $0x80] sm:$0xff]
    %v579 = vld [vmem:[#allocation16 + $0x88] sm:$0xff]
    %v580 = vld [vmem:[#allocation16 + $0x90] sm:$0xff]
    %v581 = vld [vmem:[#allocation16 + $0x98] sm:$0xff]
    %v582 = vld [vmem:[#allocation16 + $0xa0] sm:$0xff]
    %v583 = vld [vmem:[#allocation16 + $0xa8] sm:$0xff]
    %v584 = vld [vmem:[#allocation16 + $0xb0] sm:$0xff]
    %v585 = vld [vmem:[#allocation16 + $0xb8] sm:$0xff]
    %v586 = vld [vmem:[#allocation16 + $0xc0] sm:$0xff]
    %v587 = vld [vmem:[#allocation16 + $0xc8] sm:$0xff]
    %v588 = vld [vmem:[#allocation16 + $0xd0] sm:$0xff]
    %v589 = vld [vmem:[#allocation16 + $0xd8] sm:$0xff]
    %v590 = vld [vmem:[#allocation16 + $0xe0] sm:$0xff]
    %v591 = vld [vmem:[#allocation16 + $0xe8] sm:$0xff]
    %v592 = vld [vmem:[#allocation16 + $0xf0] sm:$0xff]
    %v593 = vld [vmem:[#allocation16 + $0xf8] sm:$0xff]
    %v594 = vld [vmem:[#allocation16 + $0x100] sm:$0xff]
    %v595 = vld [vmem:[#allocation16 + $0x108] sm:$0xff]
    %v596 = vld [vmem:[#allocation16 + $0x110] sm:$0xff]
    %v597 = vld [vmem:[#allocation16 + $0x118] sm:$0xff]
    %v598 = vld [vmem:[#allocation16 + $0x120] sm:$0xff]
    %v599 = vld [vmem:[#allocation16 + $0x128] sm:$0xff]
    %v600 = vld [vmem:[#allocation16 + $0x130] sm:$0xff]
    %v601 = vld [vmem:[#allocation16 + $0x138] sm:$0xff]
    %v602 = vld [vmem:[#allocation16 + $0x140] sm:$0xff]
    %v603 = vld [vmem:[#allocation16 + $0x148] sm:$0xff]
    %v604 = vld [vmem:[#allocation16 + $0x150] sm:$0xff]
    %v605 = vld [vmem:[#allocation16 + $0x158] sm:$0xff]
    %v606 = vld [vmem:[#allocation16 + $0x160] sm:$0xff]
    %v607 = vld [vmem:[#allocation16 + $0x168] sm:$0xff]
    %v608 = vld [vmem:[#allocation16 + $0x170] sm:$0xff]
    %v609 = vld [vmem:[#allocation16 + $0x178] sm:$0xff]
    %v610 = vld [vmem:[#allocation16 + $0x180] sm:$0xff]
    %v611 = vld [vmem:[#allocation16 + $0x188] sm:$0xff]
    %v612 = vld [vmem:[#allocation16 + $0x190] sm:$0xff]
    %v613 = vld [vmem:[#allocation16 + $0x198] sm:$0xff]
    %v614 = vld [vmem:[#allocation16 + $0x1a0] sm:$0xff]
    %v615 = vld [vmem:[#allocation16 + $0x1a8] sm:$0xff]
    %v616 = vld [vmem:[#allocation16 + $0x1b0] sm:$0xff]
    %v617 = vld [vmem:[#allocation16 + $0x1b8] sm:$0xff]
    %v618 = vld [vmem:[#allocation16 + $0x1c0] sm:$0xff]
    %v619 = vld [vmem:[#allocation16 + $0x1c8] sm:$0xff]
    %v620 = vld [vmem:[#allocation16 + $0x1d0] sm:$0xff]
    %v621 = vld [vmem:[#allocation16 + $0x1d8] sm:$0xff]
    %v622 = vld [vmem:[#allocation16 + $0x1e0] sm:$0xff]
    %v623 = vld [vmem:[#allocation16 + $0x1e8] sm:$0xff]
    %v624 = vld [vmem:[#allocation16 + $0x1f0] sm:$0xff]
    %v625 = vld [vmem:[#allocation16 + $0x1f8] sm:$0xff]
    %v626 = vld [vmem:[#allocation18] sm:$0xff]
    %v628 = vperm.slane %v626, 0
    %v629 = vperm.slane %v626, 1
    %v630 = vperm.slane %v626, 2
    %v631 = vperm.slane %v626, 3
    %v632 = vperm.slane %v626, 4
    %v633 = vperm.slane %v626, 5
    %v634 = vperm.slane %v626, 6
    %v635 = vperm.slane %v626, 7
    %v708 = vunpack.c.l.b16 %v562
    %v709 = vunpack.c.h.b16 %v562
    %v710 = vunpack.c.l.b16 %v563
    %v711 = vunpack.c.h.b16 %v563
    %v712 = vunpack.c.l.b16 %v564
    %v713 = vunpack.c.h.b16 %v564
    %v714 = vunpack.c.l.b16 %v565
    %v715 = vunpack.c.h.b16 %v565
    %v716 = vunpack.c.l.b16 %v566
    %v717 = vunpack.c.h.b16 %v566
    %v718 = vunpack.c.l.b16 %v567
    %v719 = vunpack.c.h.b16 %v567
    %v720 = vunpack.c.l.b16 %v568
    %v721 = vunpack.c.h.b16 %v568
    %v722 = vunpack.c.l.b16 %v569
    %v723 = vunpack.c.h.b16 %v569
    %v724 = vunpack.c.l.b16 %v570
    %v725 = vunpack.c.h.b16 %v570
    %v726 = vunpack.c.l.b16 %v571
    %v727 = vunpack.c.h.b16 %v571
    %v728 = vunpack.c.l.b16 %v572
    %v729 = vunpack.c.h.b16 %v572
    %v730 = vunpack.c.l.b16 %v573
    %v731 = vunpack.c.h.b16 %v573
    %v732 = vunpack.c.l.b16 %v574
    %v733 = vunpack.c.h.b16 %v574
    %v734 = vunpack.c.l.b16 %v575
    %v735 = vunpack.c.h.b16 %v575
    %v736 = vunpack.c.l.b16 %v576
    %v737 = vunpack.c.h.b16 %v576
    %v738 = vunpack.c.l.b16 %v577
    %v739 = vunpack.c.h.b16 %v577
    %v740 = vunpack.c.l.b16 %v578
    %v741 = vunpack.c.h.b16 %v578
    %v742 = vunpack.c.l.b16 %v579
    %v743 = vunpack.c.h.b16 %v579
    %v744 = vunpack.c.l.b16 %v580
    %v745 = vunpack.c.h.b16 %v580
    %v746 = vunpack.c.l.b16 %v581
    %v747 = vunpack.c.h.b16 %v581
    %v748 = vunpack.c.l.b16 %v582
    %v749 = vunpack.c.h.b16 %v582
    %v750 = vunpack.c.l.b16 %v583
    %v751 = vunpack.c.h.b16 %v583
    %v752 = vunpack.c.l.b16 %v584
    %v753 = vunpack.c.h.b16 %v584
    %v754 = vunpack.c.l.b16 %v585
    %v755 = vunpack.c.h.b16 %v585
    %v756 = vunpack.c.l.b16 %v586
    %v757 = vunpack.c.h.b16 %v586
    %v758 = vunpack.c.l.b16 %v587
    %v759 = vunpack.c.h.b16 %v587
    %v760 = vunpack.c.l.b16 %v588
    %v761 = vunpack.c.h.b16 %v588
    %v762 = vunpack.c.l.b16 %v589
    %v763 = vunpack.c.h.b16 %v589
    %v764 = vunpack.c.l.b16 %v590
    %v765 = vunpack.c.h.b16 %v590
    %v766 = vunpack.c.l.b16 %v591
    %v767 = vunpack.c.h.b16 %v591
    %v768 = vunpack.c.l.b16 %v592
    %v769 = vunpack.c.h.b16 %v592
    %v770 = vunpack.c.l.b16 %v593
    %v771 = vunpack.c.h.b16 %v593
    %v772 = vunpack.c.l.b16 %v594
    %v773 = vunpack.c.h.b16 %v594
    %v774 = vunpack.c.l.b16 %v595
    %v775 = vunpack.c.h.b16 %v595
    %v776 = vunpack.c.l.b16 %v596
    %v777 = vunpack.c.h.b16 %v596
    %v778 = vunpack.c.l.b16 %v597
    %v779 = vunpack.c.h.b16 %v597
    %v780 = vunpack.c.l.b16 %v598
    %v781 = vunpack.c.h.b16 %v598
    %v782 = vunpack.c.l.b16 %v599
    %v783 = vunpack.c.h.b16 %v599
    %v784 = vunpack.c.l.b16 %v600
    %v785 = vunpack.c.h.b16 %v600
    %v786 = vunpack.c.l.b16 %v601
    %v787 = vunpack.c.h.b16 %v601
    %v788 = vunpack.c.l.b16 %v602
    %v789 = vunpack.c.h.b16 %v602
    %v790 = vunpack.c.l.b16 %v603
    %v791 = vunpack.c.h.b16 %v603
    %v792 = vunpack.c.l.b16 %v604
    %v793 = vunpack.c.h.b16 %v604
    %v794 = vunpack.c.l.b16 %v605
    %v795 = vunpack.c.h.b16 %v605
    %v796 = vunpack.c.l.b16 %v606
    %v797 = vunpack.c.h.b16 %v606
    %v798 = vunpack.c.l.b16 %v607
    %v799 = vunpack.c.h.b16 %v607
    %v800 = vunpack.c.l.b16 %v608
    %v801 = vunpack.c.h.b16 %v608
    %v802 = vunpack.c.l.b16 %v609
    %v803 = vunpack.c.h.b16 %v609
    %v804 = vunpack.c.l.b16 %v610
    %v805 = vunpack.c.h.b16 %v610
    %v806 = vunpack.c.l.b16 %v611
    %v807 = vunpack.c.h.b16 %v611
    %v808 = vunpack.c.l.b16 %v612
    %v809 = vunpack.c.h.b16 %v612
    %v810 = vunpack.c.l.b16 %v613
    %v811 = vunpack.c.h.b16 %v613
    %v812 = vunpack.c.l.b16 %v614
    %v813 = vunpack.c.h.b16 %v614
    %v814 = vunpack.c.l.b16 %v615
    %v815 = vunpack.c.h.b16 %v615
    %v816 = vunpack.c.l.b16 %v616
    %v817 = vunpack.c.h.b16 %v616
    %v818 = vunpack.c.l.b16 %v617
    %v819 = vunpack.c.h.b16 %v617
    %v820 = vunpack.c.l.b16 %v618
    %v821 = vunpack.c.h.b16 %v618
    %v822 = vunpack.c.l.b16 %v619
    %v823 = vunpack.c.h.b16 %v619
    %v824 = vunpack.c.l.b16 %v620
    %v825 = vunpack.c.h.b16 %v620
    %v826 = vunpack.c.l.b16 %v621
    %v827 = vunpack.c.h.b16 %v621
    %v828 = vunpack.c.l.b16 %v622
    %v829 = vunpack.c.h.b16 %v622
    %v830 = vunpack.c.l.b16 %v623
    %v831 = vunpack.c.h.b16 %v623
    %v832 = vunpack.c.l.b16 %v624
    %v833 = vunpack.c.h.b16 %v624
    %v834 = vunpack.c.l.b16 %v625
    %v835 = vunpack.c.h.b16 %v625
    %v836 = vpack.c.b16 %v716, %v708
    %v837 = vpack.c.b16 %v717, %v709
    %v838 = vpack.c.b16 %v718, %v710
    %v839 = vpack.c.b16 %v719, %v711
    %v840 = vpack.c.b16 %v720, %v712
    %v841 = vpack.c.b16 %v721, %v713
    %v842 = vpack.c.b16 %v722, %v714
    %v843 = vpack.c.b16 %v723, %v715
    %v844 = vpack.c.b16 %v732, %v724
    %v845 = vpack.c.b16 %v733, %v725
    %v846 = vpack.c.b16 %v734, %v726
    %v847 = vpack.c.b16 %v735, %v727
    %v848 = vpack.c.b16 %v736, %v728
    %v849 = vpack.c.b16 %v737, %v729
    %v850 = vpack.c.b16 %v738, %v730
    %v851 = vpack.c.b16 %v739, %v731
    %v852 = vpack.c.b16 %v748, %v740
    %v853 = vpack.c.b16 %v749, %v741
    %v854 = vpack.c.b16 %v750, %v742
    %v855 = vpack.c.b16 %v751, %v743
    %v856 = vpack.c.b16 %v752, %v744
    %v857 = vpack.c.b16 %v753, %v745
    %v858 = vpack.c.b16 %v754, %v746
    %v859 = vpack.c.b16 %v755, %v747
    %v860 = vpack.c.b16 %v764, %v756
    %v861 = vpack.c.b16 %v765, %v757
    %v862 = vpack.c.b16 %v766, %v758
    %v863 = vpack.c.b16 %v767, %v759
    %v864 = vpack.c.b16 %v768, %v760
    %v865 = vpack.c.b16 %v769, %v761
    %v866 = vpack.c.b16 %v770, %v762
    %v867 = vpack.c.b16 %v771, %v763
    %v868 = vpack.c.b16 %v780, %v772
    %v869 = vpack.c.b16 %v781, %v773
    %v870 = vpack.c.b16 %v782, %v774
    %v871 = vpack.c.b16 %v783, %v775
    %v872 = vpack.c.b16 %v784, %v776
    %v873 = vpack.c.b16 %v785, %v777
    %v874 = vpack.c.b16 %v786, %v778
    %v875 = vpack.c.b16 %v787, %v779
    %v876 = vpack.c.b16 %v796, %v788
    %v877 = vpack.c.b16 %v797, %v789
    %v878 = vpack.c.b16 %v798, %v790
    %v879 = vpack.c.b16 %v799, %v791
    %v880 = vpack.c.b16 %v800, %v792
    %v881 = vpack.c.b16 %v801, %v793
    %v882 = vpack.c.b16 %v802, %v794
    %v883 = vpack.c.b16 %v803, %v795
    %v884 = vpack.c.b16 %v812, %v804
    %v885 = vpack.c.b16 %v813, %v805
    %v886 = vpack.c.b16 %v814, %v806
    %v887 = vpack.c.b16 %v815, %v807
    %v888 = vpack.c.b16 %v816, %v808
    %v889 = vpack.c.b16 %v817, %v809
    %v890 = vpack.c.b16 %v818, %v810
    %v891 = vpack.c.b16 %v819, %v811
    %v892 = vpack.c.b16 %v828, %v820
    %v893 = vpack.c.b16 %v829, %v821
    %v894 = vpack.c.b16 %v830, %v822
    %v895 = vpack.c.b16 %v831, %v823
    %v896 = vpack.c.b16 %v832, %v824
    %v897 = vpack.c.b16 %v833, %v825
    %v898 = vpack.c.b16 %v834, %v826
    %v899 = vpack.c.b16 %v835, %v827
    %964 = vmatpush.bf16.msra.mxu0 %v892
    %965 = vmatpush.bf16.msra.mxu0 %v884
    %966 = vmatpush.bf16.msra.mxu0 %v876
    %967 = vmatpush.bf16.msra.mxu0 %v868
    %968 = vmatpush.bf16.msra.mxu0 %v860
    %969 = vmatpush.bf16.msra.mxu0 %v852
    %970 = vmatpush.bf16.msra.mxu0 %v844
    %971 = vmatpush.bf16.msra.mxu0 %v836
    %972 = vmatmul.bf16.gmra.mxu0 %v561
    %v973 = vpop.f32.mrf.mxu0
    %v974 = vadd.f32 %v628, %v973
    %v975 = vpop.f32.mrf.mxu0
    %976 = vdwg.mxu0
    %977 = vmatpush.bf16.msra.mxu0 %v893
    %978 = vmatpush.bf16.msra.mxu0 %v885
    %979 = vmatpush.bf16.msra.mxu0 %v877
    %980 = vmatpush.bf16.msra.mxu0 %v869
    %981 = vmatpush.bf16.msra.mxu0 %v861
    %982 = vmatpush.bf16.msra.mxu0 %v853
    %983 = vmatpush.bf16.msra.mxu0 %v845
    %984 = vmatpush.bf16.msra.mxu0 %v837
    %985 = vmatmul.bf16.gmra.mxu0 %v561
    %v986 = vpop.f32.mrf.mxu0
    %v987 = vadd.f32 %v629, %v986
    %v988 = vpop.f32.mrf.mxu0
    %989 = vdwg.mxu0
    %990 = vmatpush.bf16.msra.mxu0 %v894
    %991 = vmatpush.bf16.msra.mxu0 %v886
    %992 = vmatpush.bf16.msra.mxu0 %v878
    %993 = vmatpush.bf16.msra.mxu0 %v870
    %994 = vmatpush.bf16.msra.mxu0 %v862
    %995 = vmatpush.bf16.msra.mxu0 %v854
    %996 = vmatpush.bf16.msra.mxu0 %v846
    %997 = vmatpush.bf16.msra.mxu0 %v838
    %998 = vmatmul.bf16.gmra.mxu0 %v561
    %v999 = vpop.f32.mrf.mxu0
    %v1000 = vadd.f32 %v630, %v999
    %v1001 = vpop.f32.mrf.mxu0
    %1002 = vdwg.mxu0
    %1003 = vmatpush.bf16.msra.mxu0 %v895
    %1004 = vmatpush.bf16.msra.mxu0 %v887
    %1005 = vmatpush.bf16.msra.mxu0 %v879
    %1006 = vmatpush.bf16.msra.mxu0 %v871
    %1007 = vmatpush.bf16.msra.mxu0 %v863
    %1008 = vmatpush.bf16.msra.mxu0 %v855
    %1009 = vmatpush.bf16.msra.mxu0 %v847
    %1010 = vmatpush.bf16.msra.mxu0 %v839
    %1011 = vmatmul.bf16.gmra.mxu0 %v561
    %v1012 = vpop.f32.mrf.mxu0
    %v1013 = vadd.f32 %v631, %v1012
    %v1014 = vpop.f32.mrf.mxu0
    %1015 = vdwg.mxu0
    %1016 = vmatpush.bf16.msra.mxu0 %v896
    %1017 = vmatpush.bf16.msra.mxu0 %v888
    %1018 = vmatpush.bf16.msra.mxu0 %v880
    %1019 = vmatpush.bf16.msra.mxu0 %v872
    %1020 = vmatpush.bf16.msra.mxu0 %v864
    %1021 = vmatpush.bf16.msra.mxu0 %v856
    %1022 = vmatpush.bf16.msra.mxu0 %v848
    %1023 = vmatpush.bf16.msra.mxu0 %v840
    %1024 = vmatmul.bf16.gmra.mxu0 %v561
    %v1025 = vpop.f32.mrf.mxu0
    %v1026 = vadd.f32 %v632, %v1025
    %v1027 = vpop.f32.mrf.mxu0
    %1028 = vdwg.mxu0
    %1029 = vmatpush.bf16.msra.mxu0 %v897
    %1030 = vmatpush.bf16.msra.mxu0 %v889
    %1031 = vmatpush.bf16.msra.mxu0 %v881
    %1032 = vmatpush.bf16.msra.mxu0 %v873
    %1033 = vmatpush.bf16.msra.mxu0 %v865
    %1034 = vmatpush.bf16.msra.mxu0 %v857
    %1035 = vmatpush.bf16.msra.mxu0 %v849
    %1036 = vmatpush.bf16.msra.mxu0 %v841
    %1037 = vmatmul.bf16.gmra.mxu0 %v561
    %v1038 = vpop.f32.mrf.mxu0
    %v1039 = vadd.f32 %v633, %v1038
    %v1040 = vpop.f32.mrf.mxu0
    %1041 = vdwg.mxu0
    %1042 = vmatpush.bf16.msra.mxu0 %v898
    %1043 = vmatpush.bf16.msra.mxu0 %v890
    %1044 = vmatpush.bf16.msra.mxu0 %v882
    %1045 = vmatpush.bf16.msra.mxu0 %v874
    %1046 = vmatpush.bf16.msra.mxu0 %v866
    %1047 = vmatpush.bf16.msra.mxu0 %v858
    %1048 = vmatpush.bf16.msra.mxu0 %v850
    %1049 = vmatpush.bf16.msra.mxu0 %v842
    %1050 = vmatmul.bf16.gmra.mxu0 %v561
    %v1051 = vpop.f32.mrf.mxu0
    %v1052 = vadd.f32 %v634, %v1051
    %v1053 = vpop.f32.mrf.mxu0
    %1054 = vdwg.mxu0
    %1055 = vmatpush.bf16.msra.mxu0 %v899
    %1056 = vmatpush.bf16.msra.mxu0 %v891
    %1057 = vmatpush.bf16.msra.mxu0 %v883
    %1058 = vmatpush.bf16.msra.mxu0 %v875
    %1059 = vmatpush.bf16.msra.mxu0 %v867
    %1060 = vmatpush.bf16.msra.mxu0 %v859
    %1061 = vmatpush.bf16.msra.mxu0 %v851
    %1062 = vmatpush.bf16.msra.mxu0 %v843
    %1063 = vmatmul.bf16.gmra.mxu0 %v561
    %v1064 = vpop.f32.mrf.mxu0
    %v1065 = vadd.f32 %v635, %v1064
    %v1066 = vpop.f32.mrf.mxu0
    %1067 = vdwg.mxu0
    %s1068 = smul.u32 0, 1024
    %s1069 = sshra.s32 %s1068, 7
    %s1070 = sand.u32 %s1068, 127
    %s1071 = smul.addr %s1069, 8
    %s1072 = scalar_lea.vmem [#allocation19], %s1071
    %1073 = vst [vmem:[%s1072] sm:$0xff] %v974
    %1074 = vst [vmem:[%s1072 + $0x8] sm:$0xff] %v987
    %1075 = vst [vmem:[%s1072 + $0x10] sm:$0xff] %v1000
    %1076 = vst [vmem:[%s1072 + $0x18] sm:$0xff] %v1013
    %1077 = vst [vmem:[%s1072 + $0x20] sm:$0xff] %v1026
    %1078 = vst [vmem:[%s1072 + $0x28] sm:$0xff] %v1039
    %1079 = vst [vmem:[%s1072 + $0x30] sm:$0xff] %v1052
    %1080 = vst [vmem:[%s1072 + $0x38] sm:$0xff] %v1065
    %v1081 = vld [vmem:[#allocation5] sm:$0xff]
    %v1082 = vmax.f32 %v974, %v1026
    %v1083 = vmax.f32 %v987, %v1039
    %v1084 = vmax.f32 %v1000, %v1052
    %v1085 = vmax.f32 %v1013, %v1065
    %v1086 = vmax.f32 %v1082, %v1083
    %v1087 = vmax.f32 %v1084, %v1085
    %v1088 = vmax.f32 %v1086, %v1087
    %1089 = vmax.xlane.f32.xlu0 %v1088
    %v1090 = vpop.xlane.xlu0 %1089
    %v1091 = vmax.f32 %v1081, %v1090
    %v1092 = vld [vmem:[#allocation6] sm:$0xff]
    %v1093 = vsub.f32 %v1081, %v1091
    %v1094 = vmul.f32 %v1093, 1.442695
    %v1095 = vpow.pop %v1094
    %v1096 = vmul.f32 %v1092, %v1095
    %1098 = vset.pattern.permute.xlu0 0
    %1099 = vperm.xlu0 %1098, %v1091
    %v1100 = vpop.permute.xlu0 %1099
    %v1102 = vsub.f32 %v974, %v1100
    %v1103 = vsub.f32 %v987, %v1100
    %v1104 = vsub.f32 %v1000, %v1100
    %v1105 = vsub.f32 %v1013, %v1100
    %v1106 = vsub.f32 %v1026, %v1100
    %v1107 = vsub.f32 %v1039, %v1100
    %v1108 = vsub.f32 %v1052, %v1100
    %v1109 = vsub.f32 %v1065, %v1100
    %v1110 = vmul.f32 %v1102, 1.442695
    %v1111 = vpow.pop %v1110
    %v1112 = vmul.f32 %v1103, 1.442695
    %v1113 = vpow.pop %v1112
    %v1114 = vmul.f32 %v1104, 1.442695
    %v1115 = vpow.pop %v1114
    %v1116 = vmul.f32 %v1105, 1.442695
    %v1117 = vpow.pop %v1116
    %v1118 = vmul.f32 %v1106, 1.442695
    %v1119 = vpow.pop %v1118
    %v1120 = vmul.f32 %v1107, 1.442695
    %v1121 = vpow.pop %v1120
    %v1122 = vmul.f32 %v1108, 1.442695
    %v1123 = vpow.pop %v1122
    %v1124 = vmul.f32 %v1109, 1.442695
    %v1125 = vpow.pop %v1124
    %v1126 = vadd.f32 %v1111, %v1113
    %v1127 = vadd.f32 %v1126, %v1115
    %v1128 = vadd.f32 %v1127, %v1117
    %v1129 = vadd.f32 %v1128, %v1119
    %v1130 = vadd.f32 %v1129, %v1121
    %v1131 = vadd.f32 %v1130, %v1123
    %v1132 = vadd.f32 %v1131, %v1125
    %1133 = vadd.xlane.f32.xlu0 %v1132
    %v1134 = vpop.xlane.xlu0 %1133
    %v1135 = vadd.f32 %v1096, %v1134
    %vm1136 = vcmask 7168
    %1137 = vst.msk [vmem:[#allocation6] sm:$0xff] %vm1136, %v1135
    %1138 = vst.msk [vmem:[#allocation5] sm:$0xff] %vm1136, %v1091
    // Predicated region
    $region82: #{language_decoder_forward.1} parent=1 // pred_check
      %p1139 = pneg %p105
    $region83: #{language_decoder_forward.1} parent=1 // pred_check_branch
      %1141 = sbr.rel (%p1139) target = $region85
    $region84: #{language_decoder_forward.1} parent=1 // pred_region
      %v1142 = vld [vmem:[#allocation5] sm:$0xff]
      %v1143 = vld [vmem:[#allocation6] sm:$0xff]
      %v1144 = vlog2.pop %v1143
      %v1145 = vmul.f32 %v1144, 0.6931472
      %v1146 = vadd.f32 %v1142, %v1145
      %v1147 = vld [vmem:[#allocation19] sm:$0xff]
      %v1148 = vld [vmem:[#allocation19 + $0x8] sm:$0xff]
      %v1149 = vld [vmem:[#allocation19 + $0x10] sm:$0xff]
      %v1150 = vld [vmem:[#allocation19 + $0x18] sm:$0xff]
      %v1151 = vld [vmem:[#allocation19 + $0x20] sm:$0xff]
      %v1152 = vld [vmem:[#allocation19 + $0x28] sm:$0xff]
      %v1153 = vld [vmem:[#allocation19 + $0x30] sm:$0xff]
      %v1154 = vld [vmem:[#allocation19 + $0x38] sm:$0xff]
      %1156 = vset.pattern.permute.xlu0 0
      %1157 = vperm.xlu0 %1156, %v1146
      %v1158 = vpop.permute.xlu0 %1157
      %v1160 = vsub.f32 %v1147, %v1158
      %v1161 = vsub.f32 %v1148, %v1158
      %v1162 = vsub.f32 %v1149, %v1158
      %v1163 = vsub.f32 %v1150, %v1158
      %v1164 = vsub.f32 %v1151, %v1158
      %v1165 = vsub.f32 %v1152, %v1158
      %v1166 = vsub.f32 %v1153, %v1158
      %v1167 = vsub.f32 %v1154, %v1158
      %1168 = vst [vmem:[#allocation19] sm:$0xff] %v1160
      %1169 = vst [vmem:[#allocation19 + $0x8] sm:$0xff] %v1161
      %1170 = vst [vmem:[#allocation19 + $0x10] sm:$0xff] %v1162
      %1171 = vst [vmem:[#allocation19 + $0x18] sm:$0xff] %v1163
      %1172 = vst [vmem:[#allocation19 + $0x20] sm:$0xff] %v1164
      %1173 = vst [vmem:[#allocation19 + $0x28] sm:$0xff] %v1165
      %1174 = vst [vmem:[#allocation19 + $0x30] sm:$0xff] %v1166
      %1175 = vst [vmem:[#allocation19 + $0x38] sm:$0xff] %v1167
    $region85: #{language_decoder_forward.1} parent=1 // pred_fallthru
      _
    // Predicated region
    $region86: #{language_decoder_forward.1} parent=1 // pred_check
      _
    $region87: #{language_decoder_forward.1} parent=1 // pred_check_branch
      %1177 = sbr.rel (0) target = $region89
    $region88: #{language_decoder_forward.1} parent=1 // pred_region
      %1179 = vsyncadd [#allocation12], 0
      %s1181 = sshll.u32 [#allocation19], 4
      %s1182 = int_to_ptr.vmem [resolvable:$true] %s1181
      %s1183 = sshll.u32 %s8, 4
      %s1184 = int_to_ptr.hbm [resolvable:$true] %s1183
      %1186 = dma.vmem_to_hbm [thread:$0]  %s1182, 1024, %s1184, [#allocation12]
    $region89: #{language_decoder_forward.1} parent=1 // pred_fallthru
      _
    // Predicated region
    $region90: #{language_decoder_forward.1} parent=1 // pred_check
      _
    $region91: #{language_decoder_forward.1} parent=1 // pred_check_branch
      %1188 = sbr.rel (0) target = $region93
    $region92: #{language_decoder_forward.1} parent=1 // pred_region
      %1190 = vsyncadd [#allocation21], 0
      %s1192 = sshll.u32 [#allocation20], 4
      %s1193 = int_to_ptr.vmem [resolvable:$true] %s1192
      %s1194 = sshll.u32 %s9, 4
      %s1195 = int_to_ptr.hbm [resolvable:$true] %s1194
      %1197 = dma.vmem_to_hbm [thread:$0]  %s1193, 128, %s1195, [#allocation21]
    $region93: #{language_decoder_forward.1} parent=1 // pred_fallthru
      _
    // Predicated region
    $region94: #{language_decoder_forward.1} parent=1 // pred_check
      _
    $region95: #{language_decoder_forward.1} parent=1 // pred_check_branch
      %1199 = sbr.rel (0) target = $region97
    $region96: #{language_decoder_forward.1} parent=1 // pred_region
      %1201 = dma.done [#allocation12], 1024
    $region97: #{language_decoder_forward.1} parent=1 // pred_fallthru
      _
    // Predicated region
    $region98: #{language_decoder_forward.1} parent=1 // pred_check
      _
    $region99: #{language_decoder_forward.1} parent=1 // pred_check_branch
      %1203 = sbr.rel (0) target = $region101
    $region100: #{language_decoder_forward.1} parent=1 // pred_region
      %1205 = dma.done [#allocation21], 128
    $region101: #{language_decoder_forward.1} parent=1 // pred_fallthru
      _
    %1206 = vsyncpa [#allocation11], 1
    %1207 = vsyncpa [#allocation14], 1
    %1208 = vsyncpa [#allocation17], 1
    %1209 = vsyncpa [#allocation12], 1
    %1210 = vsyncpa [#allocation21], 1
  %1211 = vsyncmov [#allocation7]
  %s1212 = vpop.sfrf %1211
  %p1213 = scmp.eq.s32.totalorder %s1212, 0
  %p1214 = pneg %p1213
  %1216 = shalt.err (%p1214)
  %s1217 = scalar_lea.sflag [#allocation7], 1
  %1218 = vsyncmov %s1217
  %s1219 = vpop.sfrf %1218
  %p1220 = scmp.eq.s32.totalorder %s1219, 0
  %p1221 = pneg %p1220
  %1223 = shalt.err (%p1221)

</llo_original>
